<compile_context>
chip_gen: v7x
topology: tpu7x:2x2x1
jax: 0.10.0
libtpu: 0.0.40
codegen_flags: <defaults>
</compile_context>

<pallas_src>
import math
import functools

import jax
import jax.numpy as jnp
import numpy as np
from jax.experimental import pallas as pl
from jax.experimental.pallas import tpu as pltpu


def _flex_block_kernel(x_ref, cos_ref, sin_ref,
                       wq_ref, wk_ref, wv_ref, wo_ref,
                       anw_ref, fnw_ref, w1_ref, w2_ref,
                       out_ref,
                       q_scr, k_scr, v_scr, h2_scr,
                       *, n_heads, head_dim, eps):
    j = pl.program_id(1)          # hidden-dim tile index (FFN accumulation axis)
    half = head_dim // 2

    def rmsnorm(v, w):            # v: (S, D) f32, w: (1, D) f32
        ms = jnp.mean(v * v, axis=-1, keepdims=True)
        return v * jax.lax.rsqrt(ms + eps) * w

    def rotate_half(z):           # z: (S, head_dim) f32
        if head_dim % 128 == 0:
            return pltpu.roll(z, shift=half, axis=-1)        # XLU rotate
        return jnp.concatenate([z[:, half:], z[:, :half]], axis=-1)

    # ---- attention branch: runs once per batch element (first hidden step) ----
    @pl.when(j == 0)
    def _attention():
        x = x_ref[0]                                          # (S, D) f32
        h = rmsnorm(x, anw_ref[...]).astype(jnp.bfloat16)

        # Full-D projections (good MXU fill); results go straight into bf16
        # head-major scratch so no f32 (S, D) temporaries stay live.
        q = jnp.dot(h, wq_ref[...],
                    preferred_element_type=jnp.float32).astype(jnp.bfloat16)
        for hh in range(n_heads):
            q_scr[hh] = q[:, hh * head_dim:(hh + 1) * head_dim]
        k = jnp.dot(h, wk_ref[...],
                    preferred_element_type=jnp.float32).astype(jnp.bfloat16)
        for hh in range(n_heads):
            k_scr[hh] = k[:, hh * head_dim:(hh + 1) * head_dim]
        v = jnp.dot(h, wv_ref[...],
                    preferred_element_type=jnp.float32).astype(jnp.bfloat16)
        for hh in range(n_heads):
            v_scr[hh] = v[:, hh * head_dim:(hh + 1) * head_dim]

        # Residual accumulator lives in the resident output block.
        out_ref[0] = x

        def head_body(hh, carry):
            cos = cos_ref[...]                                # (S, hd) = [ c | c ]
            sin = sin_ref[...]                                # (S, hd) = [-s | s ]
            qs = q_scr[hh].astype(jnp.float32)
            ks = k_scr[hh].astype(jnp.float32)
            # rotate-half RoPE (wq/wk columns were de-interleaved on the host)
            qs = (qs * cos + rotate_half(qs) * sin).astype(jnp.bfloat16)
            ks = (ks * cos + rotate_half(ks) * sin).astype(jnp.bfloat16)

            # scores: contract last dims; 1/sqrt(head_dim) already folded into wq
            s = jax.lax.dot_general(qs, ks, (((1,), (1,)), ((), ())),
                                    preferred_element_type=jnp.float32)
            s = s - jnp.max(s, axis=-1, keepdims=True)
            p = jnp.exp(s)
            p = p * pl.reciprocal(jnp.sum(p, axis=-1, keepdims=True), approx=True)

            pv = jnp.dot(p.astype(jnp.bfloat16), v_scr[hh],
                         preferred_element_type=jnp.float32)
            # per-head wo slice, accumulated straight into the residual
            out_ref[0] = out_ref[0] + jnp.dot(
                pv.astype(jnp.bfloat16), wo_ref[hh],
                preferred_element_type=jnp.float32)
            return carry

        jax.lax.fori_loop(0, n_heads, head_body, 0)

        # input to the FFN (second RMSNorm), kept in bf16 scratch
        h2_scr[...] = rmsnorm(out_ref[0], fnw_ref[...]).astype(jnp.bfloat16)

    # ---- FFN branch: one hidden-dim tile per grid step, accumulate into out ----
    g = jnp.dot(h2_scr[...], w1_ref[...], preferred_element_type=jnp.float32)
    g = g * jax.nn.sigmoid(g)                                 # SiLU in f32
    out_ref[0] = out_ref[0] + jnp.dot(
        g.astype(jnp.bfloat16), w2_ref[...], preferred_element_type=jnp.float32)


def _vmem_estimate_bytes(S, D, hd, n_heads, Th):
    bf, f32 = 2, 4
    est = 0
    est += 2 * S * D * f32                  # x block (double-buffered)
    est += 2 * 2 * S * hd * f32             # cos, sin
    est += 3 * 2 * D * D * bf               # wq, wk, wv (invariant, 2 bufs)
    est += 2 * n_heads * hd * D * bf        # wo (head-major)
    est += 2 * 2 * D * f32                  # norm weights
    est += 2 * D * Th * bf + 2 * Th * D * bf  # w1 / w2 tiles
    est += 2 * S * D * f32                  # out block
    est += 3 * n_heads * S * hd * bf        # q/k/v head-major scratch
    est += S * D * bf                       # h2 scratch
    est += 3 * S * S * f32                  # in-kernel score temporaries
    return est


def flex_attention_block(x, params, *, n_heads, rope_theta=10000.0, eps=1e-6,
                         hidden_tile=None):
    B, S, D = x.shape
    hd = D // n_heads
    half = hd // 2
    hidden = params["w1_t"].shape[1]

    # FFN hidden-dim tile: 256 fills the v6e/v7x MXU free dim; sweepable.
    if hidden_tile is None or hidden % hidden_tile != 0:
        for cand in (256, 128):
            if hidden % cand == 0:
                hidden_tile = cand
                break
        else:
            hidden_tile = hidden
    n_hid = hidden // hidden_tile

    # RoPE tables in rotate-half layout, (S, head_dim): cos=[c|c], sin=[-s|s]
    freqs = 1.0 / (rope_theta ** (jnp.arange(0, hd, 2, dtype=jnp.float32) / hd))
    ang = jnp.outer(jnp.arange(S, dtype=jnp.float32), freqs)        # (S, half)
    cos_h, sin_h = jnp.cos(ang), jnp.sin(ang)
    cos_t = jnp.concatenate([cos_h, cos_h], axis=-1)                # (S, hd)
    sin_t = jnp.concatenate([-sin_h, sin_h], axis=-1)               # (S, hd)

    # Host-side de-interleave of wq/wk output columns (per head: evens then odds).
    # QK^T is invariant under a common per-head feature permutation, so v / wo
    # are untouched and the block output is unchanged.
    perm = np.concatenate(
        [h * hd + np.concatenate([np.arange(0, hd, 2), np.arange(1, hd, 2)])
         for h in range(n_heads)]).astype(np.int32)
    scale = 1.0 / math.sqrt(hd)
    wq_t = (params["wq_t"][:, perm] * scale).astype(jnp.bfloat16)   # scale folded
    wk_t = params["wk_t"][:, perm].astype(jnp.bfloat16)
    wv_t = params["wv_t"].astype(jnp.bfloat16)
    wo_h = params["wo_t"].reshape(n_heads, hd, D).astype(jnp.bfloat16)
    w1_t = params["w1_t"].astype(jnp.bfloat16)
    w2_t = params["w2_t"].astype(jnp.bfloat16)

    kernel = functools.partial(_flex_block_kernel,
                               n_heads=n_heads, head_dim=hd, eps=eps)

    def inv(shape):  # grid-invariant full block
        return pl.BlockSpec(shape, lambda b, j: tuple(0 for _ in shape))

    est = _vmem_estimate_bytes(S, D, hd, n_heads, hidden_tile)
    vmem_limit = int(min(112 * 2**20, max(32 * 2**20, est * 1.5)))

    return pl.pallas_call(
        kernel,
        out_shape=jax.ShapeDtypeStruct((B, S, D), jnp.float32),
        grid_spec=pltpu.PrefetchScalarGridSpec(
            num_scalar_prefetch=0,
            grid=(B, n_hid),
            in_specs=[
                pl.BlockSpec((1, S, D), lambda b, j: (b, 0, 0)),      # x
                inv((S, hd)),                                         # cos
                inv((S, hd)),                                         # sin (signed)
                inv((D, D)),                                          # wq^T (perm, scaled)
                inv((D, D)),                                          # wk^T (perm)
                inv((D, D)),                                          # wv^T
                inv((n_heads, hd, D)),                                # wo^T (head-major)
                inv((1, D)),                                          # attn_norm w
                inv((1, D)),                                          # ffn_norm w
                pl.BlockSpec((D, hidden_tile), lambda b, j: (0, j)),  # w1^T tile
                pl.BlockSpec((hidden_tile, D), lambda b, j: (j, 0)),  # w2^T tile
            ],
            out_specs=pl.BlockSpec((1, S, D), lambda b, j: (b, 0, 0)),
            scratch_shapes=[
                pltpu.VMEM((n_heads, S, hd), jnp.bfloat16),   # q (head-major)
                pltpu.VMEM((n_heads, S, hd), jnp.bfloat16),   # k
                pltpu.VMEM((n_heads, S, hd), jnp.bfloat16),   # v
                pltpu.VMEM((S, D), jnp.bfloat16),             # ffn input h2
            ],
        ),
        compiler_params=pltpu.CompilerParams(
            dimension_semantics=("parallel", "arbitrary"),
            vmem_limit_bytes=vmem_limit),
    )(x, cos_t, sin_t, wq_t, wk_t, wv_t, wo_h,
      params["attn_norm_w"], params["ffn_norm_w"], w1_t, w2_t)


def reference_block(x, params, *, n_heads, rope_theta=10000.0, eps=1e-6):
    """Pure-JAX mirror of the PyTorch forward (interleaved RoPE, softmax attn, SiLU FFN)."""
    B, S, D = x.shape
    hd = D // n_heads
    half = hd // 2

    def rmsnorm(v, w):
        ms = jnp.mean(v * v, axis=-1, keepdims=True)
        return v * jax.lax.rsqrt(ms + eps) * w

    h = rmsnorm(x, params["attn_norm_w"])
    q = (h @ params["wq_t"]).reshape(B, S, n_heads, hd)
    k = (h @ params["wk_t"]).reshape(B, S, n_heads, hd)
    v = (h @ params["wv_t"]).reshape(B, S, n_heads, hd)

    freqs = 1.0 / (rope_theta ** (jnp.arange(0, hd, 2, dtype=jnp.float32) / hd))
    ang = jnp.outer(jnp.arange(S, dtype=jnp.float32), freqs)
    cos = jnp.cos(ang)[None, :, None, :]
    sin = jnp.sin(ang)[None, :, None, :]

    def rope(z):
        zr = z.reshape(B, S, n_heads, half, 2)
        re, im = zr[..., 0], zr[..., 1]
        re2 = re * cos - im * sin
        im2 = re * sin + im * cos
        return jnp.stack([re2, im2], axis=-1).reshape(B, S, n_heads, hd)

    q, k = rope(q), rope(k)
    q = q.transpose(0, 2, 1, 3)
    k = k.transpose(0, 2, 1, 3)
    v = v.transpose(0, 2, 1, 3)
    s = (q @ k.transpose(0, 1, 3, 2)) / math.sqrt(hd)
    a = jax.nn.softmax(s, axis=-1)
    o = (a @ v).transpose(0, 2, 1, 3).reshape(B, S, D)
    x = x + o @ params["wo_t"]
    h2 = rmsnorm(x, params["ffn_norm_w"])
    g = h2 @ params["w1_t"]
    f = (g * jax.nn.sigmoid(g)) @ params["w2_t"]
    return x + f


if __name__ == "__main__":
    B, S, dim, n_heads = 2, 8, 64, 4
    hidden = 4 * dim

    key = jax.random.PRNGKey(0)
    kx, kq, kk, kv, ko, k1, k2 = jax.random.split(key, 7)
    scale = 0.05
    params = {
        "wq_t": scale * jax.random.normal(kq, (dim, dim), jnp.float32),
        "wk_t": scale * jax.random.normal(kk, (dim, dim), jnp.float32),
        "wv_t": scale * jax.random.normal(kv, (dim, dim), jnp.float32),
        "wo_t": scale * jax.random.normal(ko, (dim, dim), jnp.float32),
        "w1_t": scale * jax.random.normal(k1, (dim, hidden), jnp.float32),
        "w2_t": scale * jax.random.normal(k2, (hidden, dim), jnp.float32),
        "attn_norm_w": jnp.ones((1, dim), jnp.float32),   # RMSNorm init = ones
        "ffn_norm_w": jnp.ones((1, dim), jnp.float32),
    }
    x = jax.random.normal(kx, (B, S, dim), jnp.float32)

    out = flex_attention_block(x, params, n_heads=n_heads)
    out = jax.block_until_ready(out)

    ref = reference_block(x, params, n_heads=n_heads)
    np.testing.assert_allclose(np.asarray(out), np.asarray(ref), rtol=2e-2, atol=2e-2)

    print("KERNEL_OK")
</pallas_src>

<mosaic_0001>
module attributes {stable_mosaic.version = 11 : i64} {
  func.func @_flex_block_kernel(%arg0: i32, %arg1: i32, %arg2: memref<1x8x64xf32, #tpu.memory_space<vmem>>, %arg3: memref<8x16xf32, #tpu.memory_space<vmem>>, %arg4: memref<8x16xf32, #tpu.memory_space<vmem>>, %arg5: memref<64x64xbf16, #tpu.memory_space<vmem>>, %arg6: memref<64x64xbf16, #tpu.memory_space<vmem>>, %arg7: memref<64x64xbf16, #tpu.memory_space<vmem>>, %arg8: memref<4x16x64xbf16, #tpu.memory_space<vmem>>, %arg9: memref<1x64xf32, #tpu.memory_space<vmem>>, %arg10: memref<1x64xf32, #tpu.memory_space<vmem>>, %arg11: memref<64x256xbf16, #tpu.memory_space<vmem>>, %arg12: memref<256x64xbf16, #tpu.memory_space<vmem>>, %arg13: memref<1x8x64xf32, #tpu.memory_space<vmem>>, %arg14: memref<4x8x16xbf16, #tpu.memory_space<vmem>>, %arg15: memref<4x8x16xbf16, #tpu.memory_space<vmem>>, %arg16: memref<4x8x16xbf16, #tpu.memory_space<vmem>>, %arg17: memref<8x64xbf16, #tpu.memory_space<vmem>>) attributes {dimension_semantics = [#tpu.dimension_semantics<parallel>, #tpu.dimension_semantics<arbitrary>], iteration_bounds = array<i64: 2, 1>, scalar_prefetch = 0 : i64, scratch_operands = 4 : i64, tpu.core_type = #tpu.core_type<tc>, window_params = [{transform_indices = @transform_0, window_bounds = array<i64: 1, 8, 64>}, {pipeline_mode = #tpu.pipeline_mode<synchronous>, transform_indices = @transform_1, window_bounds = array<i64: 8, 16>}, {pipeline_mode = #tpu.pipeline_mode<synchronous>, transform_indices = @transform_2, window_bounds = array<i64: 8, 16>}, {pipeline_mode = #tpu.pipeline_mode<synchronous>, transform_indices = @transform_3, window_bounds = array<i64: 64, 64>}, {pipeline_mode = #tpu.pipeline_mode<synchronous>, transform_indices = @transform_4, window_bounds = array<i64: 64, 64>}, {pipeline_mode = #tpu.pipeline_mode<synchronous>, transform_indices = @transform_5, window_bounds = array<i64: 64, 64>}, {pipeline_mode = #tpu.pipeline_mode<synchronous>, transform_indices = @transform_6, window_bounds = array<i64: 4, 16, 64>}, {pipeline_mode = #tpu.pipeline_mode<synchronous>, transform_indices = @transform_7, window_bounds = array<i64: 1, 64>}, {pipeline_mode = #tpu.pipeline_mode<synchronous>, transform_indices = @transform_8, window_bounds = array<i64: 1, 64>}, {transform_indices = @transform_9, window_bounds = array<i64: 64, 256>}, {transform_indices = @transform_10, window_bounds = array<i64: 256, 64>}, {transform_indices = @transform_11, window_bounds = array<i64: 1, 8, 64>}]} {
    %c0_i32 = arith.constant 0 : i32
    %0 = arith.cmpi eq, %arg1, %c0_i32 : i32
    %1 = arith.extui %0 : i1 to i32
    %c0_i32_0 = arith.constant 0 : i32
    %2 = arith.cmpi ne, %1, %c0_i32_0 : i32
    scf.if %2 {
      %c0_14 = arith.constant 0 : index
      %c0_15 = arith.constant 0 : index
      %c0_16 = arith.constant 0 : index
      %21 = vector.load %arg2[%c0_14, %c0_15, %c0_16] : memref<1x8x64xf32, #tpu.memory_space<vmem>>, vector<1x8x64xf32>
      %22 = vector.shape_cast %21 : vector<1x8x64xf32> to vector<8x64xf32>
      %c0_17 = arith.constant 0 : index
      %c0_18 = arith.constant 0 : index
      %23 = vector.load %arg9[%c0_17, %c0_18] : memref<1x64xf32, #tpu.memory_space<vmem>>, vector<1x64xf32>
      %24 = arith.mulf %22, %22 : vector<8x64xf32>
      %cst_19 = arith.constant dense<0.000000e+00> : vector<8xf32>
      %25 = vector.multi_reduction <add>, %24, %cst_19 [1] : vector<8x64xf32> to vector<8xf32>
      %26 = vector.shape_cast %25 : vector<8xf32> to vector<8x1xf32>
      %cst_20 = arith.constant 6.400000e+01 : f32
      %27 = vector.broadcast %cst_20 : f32 to vector<8x1xf32>
      %28 = arith.divf %26, %27 : vector<8x1xf32>
      %cst_21 = arith.constant 9.99999997E-7 : f32
      %29 = vector.broadcast %cst_21 : f32 to vector<8x1xf32>
      %30 = arith.addf %28, %29 : vector<8x1xf32>
      %31 = math.rsqrt %30 : vector<8x1xf32>
      %32 = vector.broadcast %31 : vector<8x1xf32> to vector<8x64xf32>
      %33 = arith.mulf %22, %32 : vector<8x64xf32>
      %34 = vector.broadcast %23 : vector<1x64xf32> to vector<8x64xf32>
      %35 = arith.mulf %33, %34 : vector<8x64xf32>
      %36 = arith.truncf %35 : vector<8x64xf32> to vector<8x64xbf16>
      %c0_22 = arith.constant 0 : index
      %c0_23 = arith.constant 0 : index
      %37 = vector.load %arg5[%c0_22, %c0_23] : memref<64x64xbf16, #tpu.memory_space<vmem>>, vector<64x64xbf16>
      %cst_24 = arith.constant dense<0.000000e+00> : vector<8x64xf32>
      %38 = tpu.matmul %36, %37, %cst_24 {dimension_numbers = #tpu.dot_dimension_numbers<[1], [0], [0], [1], [0, 0, 1, 1], [], []>} : vector<8x64xbf16>, vector<64x64xbf16>, vector<8x64xf32> -> vector<8x64xf32>
      %39 = arith.truncf %38 : vector<8x64xf32> to vector<8x64xbf16>
      %40 = vector.extract_strided_slice %39 {offsets = [0, 0], sizes = [8, 16], strides = [1, 1]} : vector<8x64xbf16> to vector<8x16xbf16>
      %c0_25 = arith.constant 0 : index
      %c0_26 = arith.constant 0 : index
      %c0_27 = arith.constant 0 : index
      %41 = vector.load %arg14[%c0_25, %c0_26, %c0_27] : memref<4x8x16xbf16, #tpu.memory_space<vmem>>, vector<1x8x16xbf16>
      %42 = vector.shape_cast %41 : vector<1x8x16xbf16> to vector<8x16xbf16>
      %43 = vector.shape_cast %40 : vector<8x16xbf16> to vector<1x8x16xbf16>
      tpu.vector_store %arg14[%c0_25, %c0_26, %c0_27], %43 {strides = array<i32>} : memref<4x8x16xbf16, #tpu.memory_space<vmem>>, vector<1x8x16xbf16>,
      %44 = vector.extract_strided_slice %39 {offsets = [0, 16], sizes = [8, 16], strides = [1, 1]} : vector<8x64xbf16> to vector<8x16xbf16>
      %c1 = arith.constant 1 : index
      %c0_28 = arith.constant 0 : index
      %c0_29 = arith.constant 0 : index
      %45 = vector.load %arg14[%c1, %c0_28, %c0_29] : memref<4x8x16xbf16, #tpu.memory_space<vmem>>, vector<1x8x16xbf16>
      %46 = vector.shape_cast %45 : vector<1x8x16xbf16> to vector<8x16xbf16>
      %47 = vector.shape_cast %44 : vector<8x16xbf16> to vector<1x8x16xbf16>
      tpu.vector_store %arg14[%c1, %c0_28, %c0_29], %47 {strides = array<i32>} : memref<4x8x16xbf16, #tpu.memory_space<vmem>>, vector<1x8x16xbf16>,
      %48 = vector.extract_strided_slice %39 {offsets = [0, 32], sizes = [8, 16], strides = [1, 1]} : vector<8x64xbf16> to vector<8x16xbf16>
      %c2 = arith.constant 2 : index
      %c0_30 = arith.constant 0 : index
      %c0_31 = arith.constant 0 : index
      %49 = vector.load %arg14[%c2, %c0_30, %c0_31] : memref<4x8x16xbf16, #tpu.memory_space<vmem>>, vector<1x8x16xbf16>
      %50 = vector.shape_cast %49 : vector<1x8x16xbf16> to vector<8x16xbf16>
      %51 = vector.shape_cast %48 : vector<8x16xbf16> to vector<1x8x16xbf16>
      tpu.vector_store %arg14[%c2, %c0_30, %c0_31], %51 {strides = array<i32>} : memref<4x8x16xbf16, #tpu.memory_space<vmem>>, vector<1x8x16xbf16>,
      %52 = vector.extract_strided_slice %39 {offsets = [0, 48], sizes = [8, 16], strides = [1, 1]} : vector<8x64xbf16> to vector<8x16xbf16>
      %c3 = arith.constant 3 : index
      %c0_32 = arith.constant 0 : index
      %c0_33 = arith.constant 0 : index
      %53 = vector.load %arg14[%c3, %c0_32, %c0_33] : memref<4x8x16xbf16, #tpu.memory_space<vmem>>, vector<1x8x16xbf16>
      %54 = vector.shape_cast %53 : vector<1x8x16xbf16> to vector<8x16xbf16>
      %55 = vector.shape_cast %52 : vector<8x16xbf16> to vector<1x8x16xbf16>
      tpu.vector_store %arg14[%c3, %c0_32, %c0_33], %55 {strides = array<i32>} : memref<4x8x16xbf16, #tpu.memory_space<vmem>>, vector<1x8x16xbf16>,
      %c0_34 = arith.constant 0 : index
      %c0_35 = arith.constant 0 : index
      %56 = vector.load %arg6[%c0_34, %c0_35] : memref<64x64xbf16, #tpu.memory_space<vmem>>, vector<64x64xbf16>
      %cst_36 = arith.constant dense<0.000000e+00> : vector<8x64xf32>
      %57 = tpu.matmul %36, %56, %cst_36 {dimension_numbers = #tpu.dot_dimension_numbers<[1], [0], [0], [1], [0, 0, 1, 1], [], []>} : vector<8x64xbf16>, vector<64x64xbf16>, vector<8x64xf32> -> vector<8x64xf32>
      %58 = arith.truncf %57 : vector<8x64xf32> to vector<8x64xbf16>
      %59 = vector.extract_strided_slice %58 {offsets = [0, 0], sizes = [8, 16], strides = [1, 1]} : vector<8x64xbf16> to vector<8x16xbf16>
      %c0_37 = arith.constant 0 : index
      %c0_38 = arith.constant 0 : index
      %c0_39 = arith.constant 0 : index
      %60 = vector.load %arg15[%c0_37, %c0_38, %c0_39] : memref<4x8x16xbf16, #tpu.memory_space<vmem>>, vector<1x8x16xbf16>
      %61 = vector.shape_cast %60 : vector<1x8x16xbf16> to vector<8x16xbf16>
      %62 = vector.shape_cast %59 : vector<8x16xbf16> to vector<1x8x16xbf16>
      tpu.vector_store %arg15[%c0_37, %c0_38, %c0_39], %62 {strides = array<i32>} : memref<4x8x16xbf16, #tpu.memory_space<vmem>>, vector<1x8x16xbf16>,
      %63 = vector.extract_strided_slice %58 {offsets = [0, 16], sizes = [8, 16], strides = [1, 1]} : vector<8x64xbf16> to vector<8x16xbf16>
      %c1_40 = arith.constant 1 : index
      %c0_41 = arith.constant 0 : index
      %c0_42 = arith.constant 0 : index
      %64 = vector.load %arg15[%c1_40, %c0_41, %c0_42] : memref<4x8x16xbf16, #tpu.memory_space<vmem>>, vector<1x8x16xbf16>
      %65 = vector.shape_cast %64 : vector<1x8x16xbf16> to vector<8x16xbf16>
      %66 = vector.shape_cast %63 : vector<8x16xbf16> to vector<1x8x16xbf16>
      tpu.vector_store %arg15[%c1_40, %c0_41, %c0_42], %66 {strides = array<i32>} : memref<4x8x16xbf16, #tpu.memory_space<vmem>>, vector<1x8x16xbf16>,
      %67 = vector.extract_strided_slice %58 {offsets = [0, 32], sizes = [8, 16], strides = [1, 1]} : vector<8x64xbf16> to vector<8x16xbf16>
      %c2_43 = arith.constant 2 : index
      %c0_44 = arith.constant 0 : index
      %c0_45 = arith.constant 0 : index
      %68 = vector.load %arg15[%c2_43, %c0_44, %c0_45] : memref<4x8x16xbf16, #tpu.memory_space<vmem>>, vector<1x8x16xbf16>
      %69 = vector.shape_cast %68 : vector<1x8x16xbf16> to vector<8x16xbf16>
      %70 = vector.shape_cast %67 : vector<8x16xbf16> to vector<1x8x16xbf16>
      tpu.vector_store %arg15[%c2_43, %c0_44, %c0_45], %70 {strides = array<i32>} : memref<4x8x16xbf16, #tpu.memory_space<vmem>>, vector<1x8x16xbf16>,
      %71 = vector.extract_strided_slice %58 {offsets = [0, 48], sizes = [8, 16], strides = [1, 1]} : vector<8x64xbf16> to vector<8x16xbf16>
      %c3_46 = arith.constant 3 : index
      %c0_47 = arith.constant 0 : index
      %c0_48 = arith.constant 0 : index
      %72 = vector.load %arg15[%c3_46, %c0_47, %c0_48] : memref<4x8x16xbf16, #tpu.memory_space<vmem>>, vector<1x8x16xbf16>
      %73 = vector.shape_cast %72 : vector<1x8x16xbf16> to vector<8x16xbf16>
      %74 = vector.shape_cast %71 : vector<8x16xbf16> to vector<1x8x16xbf16>
      tpu.vector_store %arg15[%c3_46, %c0_47, %c0_48], %74 {strides = array<i32>} : memref<4x8x16xbf16, #tpu.memory_space<vmem>>, vector<1x8x16xbf16>,
      %c0_49 = arith.constant 0 : index
      %c0_50 = arith.constant 0 : index
      %75 = vector.load %arg7[%c0_49, %c0_50] : memref<64x64xbf16, #tpu.memory_space<vmem>>, vector<64x64xbf16>
      %cst_51 = arith.constant dense<0.000000e+00> : vector<8x64xf32>
      %76 = tpu.matmul %36, %75, %cst_51 {dimension_numbers = #tpu.dot_dimension_numbers<[1], [0], [0], [1], [0, 0, 1, 1], [], []>} : vector<8x64xbf16>, vector<64x64xbf16>, vector<8x64xf32> -> vector<8x64xf32>
      %77 = arith.truncf %76 : vector<8x64xf32> to vector<8x64xbf16>
      %78 = vector.extract_strided_slice %77 {offsets = [0, 0], sizes = [8, 16], strides = [1, 1]} : vector<8x64xbf16> to vector<8x16xbf16>
      %c0_52 = arith.constant 0 : index
      %c0_53 = arith.constant 0 : index
      %c0_54 = arith.constant 0 : index
      %79 = vector.load %arg16[%c0_52, %c0_53, %c0_54] : memref<4x8x16xbf16, #tpu.memory_space<vmem>>, vector<1x8x16xbf16>
      %80 = vector.shape_cast %79 : vector<1x8x16xbf16> to vector<8x16xbf16>
      %81 = vector.shape_cast %78 : vector<8x16xbf16> to vector<1x8x16xbf16>
      tpu.vector_store %arg16[%c0_52, %c0_53, %c0_54], %81 {strides = array<i32>} : memref<4x8x16xbf16, #tpu.memory_space<vmem>>, vector<1x8x16xbf16>,
      %82 = vector.extract_strided_slice %77 {offsets = [0, 16], sizes = [8, 16], strides = [1, 1]} : vector<8x64xbf16> to vector<8x16xbf16>
      %c1_55 = arith.constant 1 : index
      %c0_56 = arith.constant 0 : index
      %c0_57 = arith.constant 0 : index
      %83 = vector.load %arg16[%c1_55, %c0_56, %c0_57] : memref<4x8x16xbf16, #tpu.memory_space<vmem>>, vector<1x8x16xbf16>
      %84 = vector.shape_cast %83 : vector<1x8x16xbf16> to vector<8x16xbf16>
      %85 = vector.shape_cast %82 : vector<8x16xbf16> to vector<1x8x16xbf16>
      tpu.vector_store %arg16[%c1_55, %c0_56, %c0_57], %85 {strides = array<i32>} : memref<4x8x16xbf16, #tpu.memory_space<vmem>>, vector<1x8x16xbf16>,
      %86 = vector.extract_strided_slice %77 {offsets = [0, 32], sizes = [8, 16], strides = [1, 1]} : vector<8x64xbf16> to vector<8x16xbf16>
      %c2_58 = arith.constant 2 : index
      %c0_59 = arith.constant 0 : index
      %c0_60 = arith.constant 0 : index
      %87 = vector.load %arg16[%c2_58, %c0_59, %c0_60] : memref<4x8x16xbf16, #tpu.memory_space<vmem>>, vector<1x8x16xbf16>
      %88 = vector.shape_cast %87 : vector<1x8x16xbf16> to vector<8x16xbf16>
      %89 = vector.shape_cast %86 : vector<8x16xbf16> to vector<1x8x16xbf16>
      tpu.vector_store %arg16[%c2_58, %c0_59, %c0_60], %89 {strides = array<i32>} : memref<4x8x16xbf16, #tpu.memory_space<vmem>>, vector<1x8x16xbf16>,
      %90 = vector.extract_strided_slice %77 {offsets = [0, 48], sizes = [8, 16], strides = [1, 1]} : vector<8x64xbf16> to vector<8x16xbf16>
      %c3_61 = arith.constant 3 : index
      %c0_62 = arith.constant 0 : index
      %c0_63 = arith.constant 0 : index
      %91 = vector.load %arg16[%c3_61, %c0_62, %c0_63] : memref<4x8x16xbf16, #tpu.memory_space<vmem>>, vector<1x8x16xbf16>
      %92 = vector.shape_cast %91 : vector<1x8x16xbf16> to vector<8x16xbf16>
      %93 = vector.shape_cast %90 : vector<8x16xbf16> to vector<1x8x16xbf16>
      tpu.vector_store %arg16[%c3_61, %c0_62, %c0_63], %93 {strides = array<i32>} : memref<4x8x16xbf16, #tpu.memory_space<vmem>>, vector<1x8x16xbf16>,
      %c0_64 = arith.constant 0 : index
      %c0_65 = arith.constant 0 : index
      %c0_66 = arith.constant 0 : index
      %94 = vector.load %arg13[%c0_64, %c0_65, %c0_66] : memref<1x8x64xf32, #tpu.memory_space<vmem>>, vector<1x8x64xf32>
      %95 = vector.shape_cast %94 : vector<1x8x64xf32> to vector<8x64xf32>
      %96 = vector.shape_cast %22 : vector<8x64xf32> to vector<1x8x64xf32>
      tpu.vector_store %arg13[%c0_64, %c0_65, %c0_66], %96 {strides = array<i32>} : memref<1x8x64xf32, #tpu.memory_space<vmem>>, vector<1x8x64xf32>,
      %c0_i32_67 = arith.constant 0 : i32
      %c4_i32 = arith.constant 4 : i32
      %97 = arith.addi %c0_i32_67, %c4_i32 : i32
      %c1_i32 = arith.constant 1 : i32
      scf.for %arg18 = %c0_i32_67 to %97 step %c1_i32  : i32 {
        %c0_79 = arith.constant 0 : index
        %c0_80 = arith.constant 0 : index
        %115 = vector.load %arg3[%c0_79, %c0_80] : memref<8x16xf32, #tpu.memory_space<vmem>>, vector<8x16xf32>
        %c0_81 = arith.constant 0 : index
        %c0_82 = arith.constant 0 : index
        %116 = vector.load %arg4[%c0_81, %c0_82] : memref<8x16xf32, #tpu.memory_space<vmem>>, vector<8x16xf32>
        %117 = arith.index_cast %arg18 : i32 to index
        %c0_83 = arith.constant 0 : index
        %c0_84 = arith.constant 0 : index
        %118 = vector.load %arg14[%117, %c0_83, %c0_84] : memref<4x8x16xbf16, #tpu.memory_space<vmem>>, vector<1x8x16xbf16>
        %119 = vector.shape_cast %118 : vector<1x8x16xbf16> to vector<8x16xbf16>
        %120 = arith.extf %119 : vector<8x16xbf16> to vector<8x16xf32>
        %121 = arith.index_cast %arg18 : i32 to index
        %c0_85 = arith.constant 0 : index
        %c0_86 = arith.constant 0 : index
        %122 = vector.load %arg15[%121, %c0_85, %c0_86] : memref<4x8x16xbf16, #tpu.memory_space<vmem>>, vector<1x8x16xbf16>
        %123 = vector.shape_cast %122 : vector<1x8x16xbf16> to vector<8x16xbf16>
        %124 = arith.extf %123 : vector<8x16xbf16> to vector<8x16xf32>
        %125 = arith.mulf %120, %115 : vector<8x16xf32>
        %126 = vector.extract_strided_slice %120 {offsets = [0, 8], sizes = [8, 8], strides = [1, 1]} : vector<8x16xf32> to vector<8x8xf32>
        %127 = vector.extract_strided_slice %120 {offsets = [0, 0], sizes = [8, 8], strides = [1, 1]} : vector<8x16xf32> to vector<8x8xf32>
        %128 = tpu.concatenate %126, %127 in 1 : vector<8x8xf32>, vector<8x8xf32> -> vector<8x16xf32>
        %129 = arith.mulf %128, %116 : vector<8x16xf32>
        %130 = arith.addf %125, %129 : vector<8x16xf32>
        %131 = arith.truncf %130 : vector<8x16xf32> to vector<8x16xbf16>
        %132 = arith.mulf %124, %115 : vector<8x16xf32>
        %133 = vector.extract_strided_slice %124 {offsets = [0, 8], sizes = [8, 8], strides = [1, 1]} : vector<8x16xf32> to vector<8x8xf32>
        %134 = vector.extract_strided_slice %124 {offsets = [0, 0], sizes = [8, 8], strides = [1, 1]} : vector<8x16xf32> to vector<8x8xf32>
        %135 = tpu.concatenate %133, %134 in 1 : vector<8x8xf32>, vector<8x8xf32> -> vector<8x16xf32>
        %136 = arith.mulf %135, %116 : vector<8x16xf32>
        %137 = arith.addf %132, %136 : vector<8x16xf32>
        %138 = arith.truncf %137 : vector<8x16xf32> to vector<8x16xbf16>
        %cst_87 = arith.constant dense<0.000000e+00> : vector<8x8xf32>
        %139 = tpu.matmul %131, %138, %cst_87 {dimension_numbers = #tpu.dot_dimension_numbers<[1], [1], [0], [0], [0, 0, 1, 0], [], []>} : vector<8x16xbf16>, vector<8x16xbf16>, vector<8x8xf32> -> vector<8x8xf32>
        %cst_88 = arith.constant dense<0xFF800000> : vector<8xf32>
        %140 = vector.multi_reduction <maximumf>, %139, %cst_88 [1] : vector<8x8xf32> to vector<8xf32>
        %141 = vector.shape_cast %140 : vector<8xf32> to vector<8x1xf32>
        %142 = vector.broadcast %141 : vector<8x1xf32> to vector<8x8xf32>
        %143 = arith.subf %139, %142 : vector<8x8xf32>
        %144 = math.exp %143 : vector<8x8xf32>
        %cst_89 = arith.constant dense<0.000000e+00> : vector<8xf32>
        %145 = vector.multi_reduction <add>, %144, %cst_89 [1] : vector<8x8xf32> to vector<8xf32>
        %146 = vector.shape_cast %145 : vector<8xf32> to vector<8x1xf32>
        %147 = tpu.reciprocal %146 {approx = true} : vector<8x1xf32> -> vector<8x1xf32>
        %148 = vector.broadcast %147 : vector<8x1xf32> to vector<8x8xf32>
        %149 = arith.mulf %144, %148 : vector<8x8xf32>
        %150 = arith.truncf %149 : vector<8x8xf32> to vector<8x8xbf16>
        %151 = arith.index_cast %arg18 : i32 to index
        %c0_90 = arith.constant 0 : index
        %c0_91 = arith.constant 0 : index
        %152 = vector.load %arg16[%151, %c0_90, %c0_91] : memref<4x8x16xbf16, #tpu.memory_space<vmem>>, vector<1x8x16xbf16>
        %153 = vector.shape_cast %152 : vector<1x8x16xbf16> to vector<8x16xbf16>
        %cst_92 = arith.constant dense<0.000000e+00> : vector<8x16xf32>
        %154 = tpu.matmul %150, %153, %cst_92 {dimension_numbers = #tpu.dot_dimension_numbers<[1], [0], [0], [1], [0, 0, 1, 1], [], []>} : vector<8x8xbf16>, vector<8x16xbf16>, vector<8x16xf32> -> vector<8x16xf32>
        %c0_93 = arith.constant 0 : index
        %c0_94 = arith.constant 0 : index
        %c0_95 = arith.constant 0 : index
        %155 = vector.load %arg13[%c0_93, %c0_94, %c0_95] : memref<1x8x64xf32, #tpu.memory_space<vmem>>, vector<1x8x64xf32>
        %156 = vector.shape_cast %155 : vector<1x8x64xf32> to vector<8x64xf32>
        %157 = arith.truncf %154 : vector<8x16xf32> to vector<8x16xbf16>
        %158 = arith.index_cast %arg18 : i32 to index
        %c0_96 = arith.constant 0 : index
        %c0_97 = arith.constant 0 : index
        %159 = vector.load %arg8[%158, %c0_96, %c0_97] : memref<4x16x64xbf16, #tpu.memory_space<vmem>>, vector<1x16x64xbf16>
        %160 = vector.shape_cast %159 : vector<1x16x64xbf16> to vector<16x64xbf16>
        %cst_98 = arith.constant dense<0.000000e+00> : vector<8x64xf32>
        %161 = tpu.matmul %157, %160, %cst_98 {dimension_numbers = #tpu.dot_dimension_numbers<[1], [0], [0], [1], [0, 0, 1, 1], [], []>} : vector<8x16xbf16>, vector<16x64xbf16>, vector<8x64xf32> -> vector<8x64xf32>
        %162 = arith.addf %156, %161 : vector<8x64xf32>
        %c0_99 = arith.constant 0 : index
        %c0_100 = arith.constant 0 : index
        %c0_101 = arith.constant 0 : index
        %163 = vector.load %arg13[%c0_99, %c0_100, %c0_101] : memref<1x8x64xf32, #tpu.memory_space<vmem>>, vector<1x8x64xf32>
        %164 = vector.shape_cast %163 : vector<1x8x64xf32> to vector<8x64xf32>
        %165 = vector.shape_cast %162 : vector<8x64xf32> to vector<1x8x64xf32>
        tpu.vector_store %arg13[%c0_99, %c0_100, %c0_101], %165 {strides = array<i32>} : memref<1x8x64xf32, #tpu.memory_space<vmem>>, vector<1x8x64xf32>,
      }
      %c4_i32_68 = arith.constant 4 : i32
      %c0_69 = arith.constant 0 : index
      %c0_70 = arith.constant 0 : index
      %c0_71 = arith.constant 0 : index
      %98 = vector.load %arg13[%c0_69, %c0_70, %c0_71] : memref<1x8x64xf32, #tpu.memory_space<vmem>>, vector<1x8x64xf32>
      %99 = vector.shape_cast %98 : vector<1x8x64xf32> to vector<8x64xf32>
      %c0_72 = arith.constant 0 : index
      %c0_73 = arith.constant 0 : index
      %100 = vector.load %arg10[%c0_72, %c0_73] : memref<1x64xf32, #tpu.memory_space<vmem>>, vector<1x64xf32>
      %101 = arith.mulf %99, %99 : vector<8x64xf32>
      %cst_74 = arith.constant dense<0.000000e+00> : vector<8xf32>
      %102 = vector.multi_reduction <add>, %101, %cst_74 [1] : vector<8x64xf32> to vector<8xf32>
      %103 = vector.shape_cast %102 : vector<8xf32> to vector<8x1xf32>
      %cst_75 = arith.constant 6.400000e+01 : f32
      %104 = vector.broadcast %cst_75 : f32 to vector<8x1xf32>
      %105 = arith.divf %103, %104 : vector<8x1xf32>
      %cst_76 = arith.constant 9.99999997E-7 : f32
      %106 = vector.broadcast %cst_76 : f32 to vector<8x1xf32>
      %107 = arith.addf %105, %106 : vector<8x1xf32>
      %108 = math.rsqrt %107 : vector<8x1xf32>
      %109 = vector.broadcast %108 : vector<8x1xf32> to vector<8x64xf32>
      %110 = arith.mulf %99, %109 : vector<8x64xf32>
      %111 = vector.broadcast %100 : vector<1x64xf32> to vector<8x64xf32>
      %112 = arith.mulf %110, %111 : vector<8x64xf32>
      %113 = arith.truncf %112 : vector<8x64xf32> to vector<8x64xbf16>
      %c0_77 = arith.constant 0 : index
      %c0_78 = arith.constant 0 : index
      %114 = vector.load %arg17[%c0_77, %c0_78] : memref<8x64xbf16, #tpu.memory_space<vmem>>, vector<8x64xbf16>
      tpu.vector_store %arg17[%c0_77, %c0_78], %113 {strides = array<i32>} : memref<8x64xbf16, #tpu.memory_space<vmem>>, vector<8x64xbf16>,
    } else {
    }
    %c0 = arith.constant 0 : index
    %c0_1 = arith.constant 0 : index
    %3 = vector.load %arg17[%c0, %c0_1] : memref<8x64xbf16, #tpu.memory_space<vmem>>, vector<8x64xbf16>
    %c0_2 = arith.constant 0 : index
    %c0_3 = arith.constant 0 : index
    %4 = vector.load %arg11[%c0_2, %c0_3] : memref<64x256xbf16, #tpu.memory_space<vmem>>, vector<64x256xbf16>
    %cst = arith.constant dense<0.000000e+00> : vector<8x256xf32>
    %5 = tpu.matmul %3, %4, %cst {dimension_numbers = #tpu.dot_dimension_numbers<[1], [0], [0], [1], [0, 0, 1, 1], [], []>} : vector<8x64xbf16>, vector<64x256xbf16>, vector<8x256xf32> -> vector<8x256xf32>
    %6 = arith.negf %5 : vector<8x256xf32>
    %7 = math.exp %6 : vector<8x256xf32>
    %cst_4 = arith.constant 1.000000e+00 : f32
    %8 = vector.broadcast %cst_4 : f32 to vector<8x256xf32>
    %9 = arith.addf %8, %7 : vector<8x256xf32>
    %10 = arith.divf %8, %9 : vector<8x256xf32>
    %11 = arith.mulf %5, %10 : vector<8x256xf32>
    %c0_5 = arith.constant 0 : index
    %c0_6 = arith.constant 0 : index
    %c0_7 = arith.constant 0 : index
    %12 = vector.load %arg13[%c0_5, %c0_6, %c0_7] : memref<1x8x64xf32, #tpu.memory_space<vmem>>, vector<1x8x64xf32>
    %13 = vector.shape_cast %12 : vector<1x8x64xf32> to vector<8x64xf32>
    %14 = arith.truncf %11 : vector<8x256xf32> to vector<8x256xbf16>
    %c0_8 = arith.constant 0 : index
    %c0_9 = arith.constant 0 : index
    %15 = vector.load %arg12[%c0_8, %c0_9] : memref<256x64xbf16, #tpu.memory_space<vmem>>, vector<256x64xbf16>
    %cst_10 = arith.constant dense<0.000000e+00> : vector<8x64xf32>
    %16 = tpu.matmul %14, %15, %cst_10 {dimension_numbers = #tpu.dot_dimension_numbers<[1], [0], [0], [1], [0, 0, 1, 1], [], []>} : vector<8x256xbf16>, vector<256x64xbf16>, vector<8x64xf32> -> vector<8x64xf32>
    %17 = arith.addf %13, %16 : vector<8x64xf32>
    %c0_11 = arith.constant 0 : index
    %c0_12 = arith.constant 0 : index
    %c0_13 = arith.constant 0 : index
    %18 = vector.load %arg13[%c0_11, %c0_12, %c0_13] : memref<1x8x64xf32, #tpu.memory_space<vmem>>, vector<1x8x64xf32>
    %19 = vector.shape_cast %18 : vector<1x8x64xf32> to vector<8x64xf32>
    %20 = vector.shape_cast %17 : vector<8x64xf32> to vector<1x8x64xf32>
    tpu.vector_store %arg13[%c0_11, %c0_12, %c0_13], %20 {strides = array<i32>} : memref<1x8x64xf32, #tpu.memory_space<vmem>>, vector<1x8x64xf32>,
    return
  }
  func.func @transform_0(%arg0: i32, %arg1: i32) -> (i32, i32, i32) {
    %c0_i32 = arith.constant 0 : i32
    %c0_i32_0 = arith.constant 0 : i32
    %c0_i32_1 = arith.constant 0 : i32
    return %arg0, %c0_i32, %c0_i32_0 : i32, i32, i32
  }
  func.func @transform_1(%arg0: i32, %arg1: i32) -> (i32, i32) {
    %c0_i32 = arith.constant 0 : i32
    %c0_i32_0 = arith.constant 0 : i32
    %c0_i32_1 = arith.constant 0 : i32
    return %c0_i32, %c0_i32_0 : i32, i32
  }
  func.func @transform_2(%arg0: i32, %arg1: i32) -> (i32, i32) {
    %c0_i32 = arith.constant 0 : i32
    %c0_i32_0 = arith.constant 0 : i32
    %c0_i32_1 = arith.constant 0 : i32
    return %c0_i32, %c0_i32_0 : i32, i32
  }
  func.func @transform_3(%arg0: i32, %arg1: i32) -> (i32, i32) {
    %c0_i32 = arith.constant 0 : i32
    %c0_i32_0 = arith.constant 0 : i32
    %c0_i32_1 = arith.constant 0 : i32
    return %c0_i32, %c0_i32_0 : i32, i32
  }
  func.func @transform_4(%arg0: i32, %arg1: i32) -> (i32, i32) {
    %c0_i32 = arith.constant 0 : i32
    %c0_i32_0 = arith.constant 0 : i32
    %c0_i32_1 = arith.constant 0 : i32
    return %c0_i32, %c0_i32_0 : i32, i32
  }
  func.func @transform_5(%arg0: i32, %arg1: i32) -> (i32, i32) {
    %c0_i32 = arith.constant 0 : i32
    %c0_i32_0 = arith.constant 0 : i32
    %c0_i32_1 = arith.constant 0 : i32
    return %c0_i32, %c0_i32_0 : i32, i32
  }
  func.func @transform_6(%arg0: i32, %arg1: i32) -> (i32, i32, i32) {
    %c0_i32 = arith.constant 0 : i32
    %c0_i32_0 = arith.constant 0 : i32
    %c0_i32_1 = arith.constant 0 : i32
    %c0_i32_2 = arith.constant 0 : i32
    return %c0_i32, %c0_i32_0, %c0_i32_1 : i32, i32, i32
  }
  func.func @transform_7(%arg0: i32, %arg1: i32) -> (i32, i32) {
    %c0_i32 = arith.constant 0 : i32
    %c0_i32_0 = arith.constant 0 : i32
    %c0_i32_1 = arith.constant 0 : i32
    return %c0_i32, %c0_i32_0 : i32, i32
  }
  func.func @transform_8(%arg0: i32, %arg1: i32) -> (i32, i32) {
    %c0_i32 = arith.constant 0 : i32
    %c0_i32_0 = arith.constant 0 : i32
    %c0_i32_1 = arith.constant 0 : i32
    return %c0_i32, %c0_i32_0 : i32, i32
  }
  func.func @transform_9(%arg0: i32, %arg1: i32) -> (i32, i32) {
    %c0_i32 = arith.constant 0 : i32
    %c0_i32_0 = arith.constant 0 : i32
    return %c0_i32, %arg1 : i32, i32
  }
  func.func @transform_10(%arg0: i32, %arg1: i32) -> (i32, i32) {
    %c0_i32 = arith.constant 0 : i32
    %c0_i32_0 = arith.constant 0 : i32
    return %arg1, %c0_i32 : i32, i32
  }
  func.func @transform_11(%arg0: i32, %arg1: i32) -> (i32, i32, i32) {
    %c0_i32 = arith.constant 0 : i32
    %c0_i32_0 = arith.constant 0 : i32
    %c0_i32_1 = arith.constant 0 : i32
    return %arg0, %c0_i32, %c0_i32_0 : i32, i32, i32
  }
}

</mosaic_0001>

<llo_original>
// kernel: tpu_custom_call.1
$region0: #{tpu_custom_call.1}
  #allocation0 [shape = 'u32[]', space=smem, size = 0x4, offset = 0x4, fixed_abs, tag = 'smem constant byte address 0x4 - core index']
  #allocation1 [shape = 'u32[144,128]{1,0:T(1,128)}', space=vmem, size = 0x12000, scoped, tag = 'internal scratch']
  #allocation2 [shape = 'bf16[4,8,16]{2,1,0:T(8,128)(2,1)}', space=vmem, size = 0x2000, scoped, tag = 'scratch operand']
  #allocation3 [shape = 'bf16[4,8,16]{2,1,0:T(8,128)(2,1)}', space=vmem, size = 0x2000, scoped, tag = 'scratch operand']
  #allocation4 [shape = 'bf16[4,8,16]{2,1,0:T(8,128)(2,1)}', space=vmem, size = 0x2000, scoped, tag = 'scratch operand']
  #allocation5 [shape = 'bf16[8,64]{1,0:T(8,128)(2,1)}', space=vmem, size = 0x800, scoped, tag = 'scratch operand']
  %s0 = inlined_call_operand.hbm [shape: f32[2,8,64], index: 0, kind: input, shape index: {}]
  %s1 = inlined_call_operand.hbm [shape: f32[8,16], index: 1, kind: input, shape index: {}]
  %s2 = inlined_call_operand.hbm [shape: f32[8,16], index: 2, kind: input, shape index: {}]
  %s3 = inlined_call_operand.vmem [shape: bf16[64,64], index: 3, kind: input, shape index: {}]
  %s4 = inlined_call_operand.vmem [shape: bf16[64,64], index: 4, kind: input, shape index: {}]
  %s5 = inlined_call_operand.vmem [shape: bf16[64,64], index: 5, kind: input, shape index: {}]
  %s6 = inlined_call_operand.vmem [shape: bf16[4,16,64], index: 6, kind: input, shape index: {}]
  %s7 = inlined_call_operand.vmem [shape: f32[1,64], index: 7, kind: input, shape index: {}]
  %s8 = inlined_call_operand.vmem [shape: f32[1,64], index: 8, kind: input, shape index: {}]
  %s9 = inlined_call_operand.vmem [shape: bf16[64,256], index: 9, kind: input, shape index: {}]
  %s10 = inlined_call_operand.vmem [shape: bf16[256,64], index: 10, kind: input, shape index: {}]
  %s11 = inlined_call_operand.hbm [shape: f32[2,8,64], index: 11, kind: output, shape index: {}]
  %s12 = sld [smem:[#allocation0]]
  $region100: #{tpu_custom_call.1} parent=0
    _
  %s14 = ssub.s32 1, %s12
  %s15 = scalar_select 0, %s14, %s12
  $region1: #{tpu_custom_call.1} parent=0
    #allocation6 [shape = 'u8[8192]{0}', space=vmem, size = 0x2000, scoped, tag = 'input window, operand 0']
    #allocation7 [shape = 's32[2]{0}', space=sflag, size = 0x8, scoped, tag = 'scoped memory for tpu_custom_call.1']
    #allocation8 [shape = 's32[2]{0}', space=sflag, size = 0x8, scoped, tag = 'scoped memory for tpu_custom_call.1']
    #allocation9 [shape = 'u8[4096]{0}', space=vmem, size = 0x1000, scoped, tag = 'input window, operand 1, single buffered']
    #allocation10 [shape = 's32[1]{0}', space=sflag, size = 0x4, scoped, tag = 'scoped memory for tpu_custom_call.1']
    #allocation11 [shape = 'u8[4096]{0}', space=vmem, size = 0x1000, scoped, tag = 'input window, operand 2, single buffered']
    #allocation12 [shape = 'u8[8192]{0}', space=vmem, size = 0x2000, scoped, tag = 'output window, operand 0']
    %16 = vsyncpa [#allocation7], 0
    %s17 = scalar_lea.sflag [#allocation7], 1
    %18 = vsyncpa %s17, 0
    %19 = vsyncpa [#allocation10], 0
    %20 = vsyncpa [#allocation8], 0
    %s21 = scalar_lea.sflag [#allocation8], 1
    %22 = vsyncpa %s21, 0
    loop: start=0, step=1, limit=4
    $region2: #{tpu_custom_call.1} parent=1 // loop_pre_header
      _
    $region3: #{tpu_custom_call.1} parent=1 // loop_header
      %s24 = sphi 0, %s28
      %p25 = scmp.ge.s32.totalorder %s24, 4
      %s31 = sphi 0, %s43
      %s32 = sphi 0, %s39
      %s33 = sphi 0, %s31
      %s34 = sphi 0, %s32
      %s35 = sphi 0, %s33
      %s36 = sphi 0, %s34
      %s46 = sphi 0, %s48
      %s49 = sphi 0, %s46
      %s50 = sphi 0, %s49
      %s66 = sphi 0, %s50
      %s70 = sphi 0, %s70
      %s72 = sphi 0, %s70
      %s73 = sphi 0, %s72
      %s87 = sphi 0, %s73
      %s91 = sphi 0, %s91
      %s93 = sphi 0, %s91
      %s94 = sphi 0, %s93
      %s108 = sphi 0, %s94
      %s112 = sphi 0, %s112
      %s114 = sphi 0, %s112
      %s115 = sphi 0, %s114
      %s129 = sphi 0, %s115
      %s133 = sphi 0, %s133
      %s135 = sphi 0, %s133
      %s136 = sphi 0, %s135
      %s150 = sphi 0, %s136
      %s154 = sphi 0, %s154
      %s156 = sphi 0, %s154
      %s157 = sphi 0, %s156
      %s171 = sphi 0, %s157
      %s175 = sphi 0, %s175
      %s177 = sphi 0, %s175
      %s178 = sphi 0, %s177
      %s192 = sphi 0, %s178
      %s196 = sphi 0, %s196
      %s198 = sphi 0, %s196
      %s199 = sphi 0, %s198
      %s213 = sphi 0, %s199
      %s217 = sphi 0, %s217
      %s219 = sphi 0, %s217
      %s220 = sphi 0, %s219
      %s234 = sphi 0, %s220
      %s240 = sphi 0, %s242
      %s243 = sphi 0, %s240
      %s244 = sphi 0, %s243
      %s260 = sphi 0, %s244
      %s266 = sphi 0, %s268
      %s269 = sphi 0, %s266
      %s270 = sphi 0, %s269
      %s286 = sphi 0, %s270
      %s292 = sphi 0, %s294
      %s295 = sphi 0, %s292
      %s296 = sphi 0, %s295
      %s312 = sphi 0, %s296
    $region4: #{tpu_custom_call.1} parent=1 // loop_header_branch
      %27 = sbr.rel (%p25) target = $region8
    $region5: #{tpu_custom_call.1} parent=1 // loop_body
      %s29 = ssub.s32 %s24, 1
      %s30 = ssub.s32 %s24, 2
      %s37 = sadd.s32 1, %s32
      %p38 = scmp.ge.s32.totalorder %s37, 1
      %s39 = scalar_select %p38, 0, %s37
      %s40 = sadd.s32 1, %s31
      %s41 = scalar_select %p38, %s40, %s31
      %p42 = scmp.ge.s32.totalorder %s41, 2
      %s43 = scalar_select %p42, 0, %s41
      %s44 = ssub.s32 %s31, %s43
      %p45 = scmp.eq.s32.totalorder %s44, 0
      %s47 = sadd.s32 %s46, 1
      %s48 = scalar_select %p45, %s46, %s47
      %p51 = pneg %p45
      %p52 = scmp.eq.s32.totalorder %s24, 1
      %p53 = por %p51, %p52
      %p54 = scmp.ne.s32.totalorder %s46, %s49
      %p55 = scmp.eq.s32.totalorder %s24, 0
      %p56 = por %p54, %p55
      %p57 = scmp.ne.s32.totalorder %s46, %s49
      %p58 = scmp.eq.s32.totalorder %s29, 1
      %p59 = por %p57, %p58
      %p60 = scmp.ne.s32.totalorder %s49, %s50
      %p61 = scmp.eq.s32.totalorder %s29, 0
      %p62 = por %p60, %p61
      %p63 = scmp.ne.s32.totalorder %s49, %s50
      %p64 = scmp.eq.s32.totalorder %s30, 1
      %p65 = por %p63, %p64
      %p67 = scmp.ne.s32.totalorder %s50, %s66
      %p68 = scmp.eq.s32.totalorder %s30, 0
      %p69 = por %p67, %p68
      %s71 = sadd.s32 %s70, 1
      %p74 = scmp.eq.s32.totalorder %s24, 1
      %p75 = scmp.ne.s32.totalorder %s70, %s72
      %p76 = scmp.eq.s32.totalorder %s24, 0
      %p77 = por %p75, %p76
      %p78 = scmp.ne.s32.totalorder %s70, %s72
      %p79 = scmp.eq.s32.totalorder %s29, 1
      %p80 = por %p78, %p79
      %p81 = scmp.ne.s32.totalorder %s72, %s73
      %p82 = scmp.eq.s32.totalorder %s29, 0
      %p83 = por %p81, %p82
      %p84 = scmp.ne.s32.totalorder %s72, %s73
      %p85 = scmp.eq.s32.totalorder %s30, 1
      %p86 = por %p84, %p85
      %p88 = scmp.ne.s32.totalorder %s73, %s87
      %p89 = scmp.eq.s32.totalorder %s30, 0
      %p90 = por %p88, %p89
      %s92 = sadd.s32 %s91, 1
      %p95 = scmp.eq.s32.totalorder %s24, 1
      %p96 = scmp.ne.s32.totalorder %s91, %s93
      %p97 = scmp.eq.s32.totalorder %s24, 0
      %p98 = por %p96, %p97
      %p99 = scmp.ne.s32.totalorder %s91, %s93
      %p100 = scmp.eq.s32.totalorder %s29, 1
      %p101 = por %p99, %p100
      %p102 = scmp.ne.s32.totalorder %s93, %s94
      %p103 = scmp.eq.s32.totalorder %s29, 0
      %p104 = por %p102, %p103
      %p105 = scmp.ne.s32.totalorder %s93, %s94
      %p106 = scmp.eq.s32.totalorder %s30, 1
      %p107 = por %p105, %p106
      %p109 = scmp.ne.s32.totalorder %s94, %s108
      %p110 = scmp.eq.s32.totalorder %s30, 0
      %p111 = por %p109, %p110
      %s113 = sadd.s32 %s112, 1
      %p116 = scmp.eq.s32.totalorder %s24, 1
      %p117 = scmp.ne.s32.totalorder %s112, %s114
      %p118 = scmp.eq.s32.totalorder %s24, 0
      %p119 = por %p117, %p118
      %p120 = scmp.ne.s32.totalorder %s112, %s114
      %p121 = scmp.eq.s32.totalorder %s29, 1
      %p122 = por %p120, %p121
      %p123 = scmp.ne.s32.totalorder %s114, %s115
      %p124 = scmp.eq.s32.totalorder %s29, 0
      %p125 = por %p123, %p124
      %p126 = scmp.ne.s32.totalorder %s114, %s115
      %p127 = scmp.eq.s32.totalorder %s30, 1
      %p128 = por %p126, %p127
      %p130 = scmp.ne.s32.totalorder %s115, %s129
      %p131 = scmp.eq.s32.totalorder %s30, 0
      %p132 = por %p130, %p131
      %s134 = sadd.s32 %s133, 1
      %p137 = scmp.eq.s32.totalorder %s24, 1
      %p138 = scmp.ne.s32.totalorder %s133, %s135
      %p139 = scmp.eq.s32.totalorder %s24, 0
      %p140 = por %p138, %p139
      %p141 = scmp.ne.s32.totalorder %s133, %s135
      %p142 = scmp.eq.s32.totalorder %s29, 1
      %p143 = por %p141, %p142
      %p144 = scmp.ne.s32.totalorder %s135, %s136
      %p145 = scmp.eq.s32.totalorder %s29, 0
      %p146 = por %p144, %p145
      %p147 = scmp.ne.s32.totalorder %s135, %s136
      %p148 = scmp.eq.s32.totalorder %s30, 1
      %p149 = por %p147, %p148
      %p151 = scmp.ne.s32.totalorder %s136, %s150
      %p152 = scmp.eq.s32.totalorder %s30, 0
      %p153 = por %p151, %p152
      %s155 = sadd.s32 %s154, 1
      %p158 = scmp.eq.s32.totalorder %s24, 1
      %p159 = scmp.ne.s32.totalorder %s154, %s156
      %p160 = scmp.eq.s32.totalorder %s24, 0
      %p161 = por %p159, %p160
      %p162 = scmp.ne.s32.totalorder %s154, %s156
      %p163 = scmp.eq.s32.totalorder %s29, 1
      %p164 = por %p162, %p163
      %p165 = scmp.ne.s32.totalorder %s156, %s157
      %p166 = scmp.eq.s32.totalorder %s29, 0
      %p167 = por %p165, %p166
      %p168 = scmp.ne.s32.totalorder %s156, %s157
      %p169 = scmp.eq.s32.totalorder %s30, 1
      %p170 = por %p168, %p169
      %p172 = scmp.ne.s32.totalorder %s157, %s171
      %p173 = scmp.eq.s32.totalorder %s30, 0
      %p174 = por %p172, %p173
      %s176 = sadd.s32 %s175, 1
      %p179 = scmp.eq.s32.totalorder %s24, 1
      %p180 = scmp.ne.s32.totalorder %s175, %s177
      %p181 = scmp.eq.s32.totalorder %s24, 0
      %p182 = por %p180, %p181
      %p183 = scmp.ne.s32.totalorder %s175, %s177
      %p184 = scmp.eq.s32.totalorder %s29, 1
      %p185 = por %p183, %p184
      %p186 = scmp.ne.s32.totalorder %s177, %s178
      %p187 = scmp.eq.s32.totalorder %s29, 0
      %p188 = por %p186, %p187
      %p189 = scmp.ne.s32.totalorder %s177, %s178
      %p190 = scmp.eq.s32.totalorder %s30, 1
      %p191 = por %p189, %p190
      %p193 = scmp.ne.s32.totalorder %s178, %s192
      %p194 = scmp.eq.s32.totalorder %s30, 0
      %p195 = por %p193, %p194
      %s197 = sadd.s32 %s196, 1
      %p200 = scmp.eq.s32.totalorder %s24, 1
      %p201 = scmp.ne.s32.totalorder %s196, %s198
      %p202 = scmp.eq.s32.totalorder %s24, 0
      %p203 = por %p201, %p202
      %p204 = scmp.ne.s32.totalorder %s196, %s198
      %p205 = scmp.eq.s32.totalorder %s29, 1
      %p206 = por %p204, %p205
      %p207 = scmp.ne.s32.totalorder %s198, %s199
      %p208 = scmp.eq.s32.totalorder %s29, 0
      %p209 = por %p207, %p208
      %p210 = scmp.ne.s32.totalorder %s198, %s199
      %p211 = scmp.eq.s32.totalorder %s30, 1
      %p212 = por %p210, %p211
      %p214 = scmp.ne.s32.totalorder %s199, %s213
      %p215 = scmp.eq.s32.totalorder %s30, 0
      %p216 = por %p214, %p215
      %s218 = sadd.s32 %s217, 1
      %p221 = scmp.eq.s32.totalorder %s24, 1
      %p222 = scmp.ne.s32.totalorder %s217, %s219
      %p223 = scmp.eq.s32.totalorder %s24, 0
      %p224 = por %p222, %p223
      %p225 = scmp.ne.s32.totalorder %s217, %s219
      %p226 = scmp.eq.s32.totalorder %s29, 1
      %p227 = por %p225, %p226
      %p228 = scmp.ne.s32.totalorder %s219, %s220
      %p229 = scmp.eq.s32.totalorder %s29, 0
      %p230 = por %p228, %p229
      %p231 = scmp.ne.s32.totalorder %s219, %s220
      %p232 = scmp.eq.s32.totalorder %s30, 1
      %p233 = por %p231, %p232
      %p235 = scmp.ne.s32.totalorder %s220, %s234
      %p236 = scmp.eq.s32.totalorder %s30, 0
      %p237 = por %p235, %p236
      %s238 = ssub.s32 %s32, %s39
      %p239 = scmp.eq.s32.totalorder %s238, 0
      %s241 = sadd.s32 %s240, 1
      %s242 = scalar_select %p239, %s240, %s241
      %p245 = pneg %p239
      %p246 = scmp.eq.s32.totalorder %s24, 1
      %p247 = por %p245, %p246
      %p248 = scmp.ne.s32.totalorder %s240, %s243
      %p249 = scmp.eq.s32.totalorder %s24, 0
      %p250 = por %p248, %p249
      %p251 = scmp.ne.s32.totalorder %s240, %s243
      %p252 = scmp.eq.s32.totalorder %s29, 1
      %p253 = por %p251, %p252
      %p254 = scmp.ne.s32.totalorder %s243, %s244
      %p255 = scmp.eq.s32.totalorder %s29, 0
      %p256 = por %p254, %p255
      %p257 = scmp.ne.s32.totalorder %s243, %s244
      %p258 = scmp.eq.s32.totalorder %s30, 1
      %p259 = por %p257, %p258
      %p261 = scmp.ne.s32.totalorder %s244, %s260
      %p262 = scmp.eq.s32.totalorder %s30, 0
      %p263 = por %p261, %p262
      %s264 = ssub.s32 %s32, %s39
      %p265 = scmp.eq.s32.totalorder %s264, 0
      %s267 = sadd.s32 %s266, 1
      %s268 = scalar_select %p265, %s266, %s267
      %p271 = pneg %p265
      %p272 = scmp.eq.s32.totalorder %s24, 1
      %p273 = por %p271, %p272
      %p274 = scmp.ne.s32.totalorder %s266, %s269
      %p275 = scmp.eq.s32.totalorder %s24, 0
      %p276 = por %p274, %p275
      %p277 = scmp.ne.s32.totalorder %s266, %s269
      %p278 = scmp.eq.s32.totalorder %s29, 1
      %p279 = por %p277, %p278
      %p280 = scmp.ne.s32.totalorder %s269, %s270
      %p281 = scmp.eq.s32.totalorder %s29, 0
      %p282 = por %p280, %p281
      %p283 = scmp.ne.s32.totalorder %s269, %s270
      %p284 = scmp.eq.s32.totalorder %s30, 1
      %p285 = por %p283, %p284
      %p287 = scmp.ne.s32.totalorder %s270, %s286
      %p288 = scmp.eq.s32.totalorder %s30, 0
      %p289 = por %p287, %p288
      %s290 = ssub.s32 %s31, %s43
      %p291 = scmp.eq.s32.totalorder %s290, 0
      %s293 = sadd.s32 %s292, 1
      %s294 = scalar_select %p291, %s292, %s293
      %p297 = pneg %p291
      %p298 = scmp.eq.s32.totalorder %s24, 1
      %p299 = por %p297, %p298
      %p300 = scmp.ne.s32.totalorder %s292, %s295
      %p301 = scmp.eq.s32.totalorder %s24, 0
      %p302 = por %p300, %p301
      %p303 = scmp.ne.s32.totalorder %s292, %s295
      %p304 = scmp.eq.s32.totalorder %s29, 1
      %p305 = por %p303, %p304
      %p306 = scmp.ne.s32.totalorder %s295, %s296
      %p307 = scmp.eq.s32.totalorder %s29, 0
      %p308 = por %p306, %p307
      %p309 = scmp.ne.s32.totalorder %s295, %s296
      %p310 = scmp.eq.s32.totalorder %s30, 1
      %p311 = por %p309, %p310
      %p313 = scmp.ne.s32.totalorder %s296, %s312
      %p314 = scmp.eq.s32.totalorder %s30, 0
      %p315 = por %p313, %p314
      %p316 = scmp.le.s32.totalorder 1, %s24
      %p317 = scmp.lt.s32.totalorder %s24, 3
      %p318 = pnand %p316, %p317
      %p319 = pneg %p318
      // Predicated region
      $region9: #{tpu_custom_call.1} parent=5 // pred_check
        _
      $region10: #{tpu_custom_call.1} parent=5 // pred_check_branch
        %321 = sbr.rel (%p318) target = $region12
      $region11: #{tpu_custom_call.1} parent=5 // pred_region
        %s322 = ssub.s32 %s24, 1
        // Predicated region
        $region13: #{tpu_custom_call.1} parent=11 // pred_check
          %p323 = pneg %p83
        $region14: #{tpu_custom_call.1} parent=11 // pred_check_branch
          %325 = sbr.rel (%p323) target = $region16
        $region15: #{tpu_custom_call.1} parent=11 // pred_region
          %s327 = ssub.s32 128, 128
          %328 = vsyncadd [#allocation10], %s327
          %s330 = sshll.u32 [#allocation9], 4
          %s331 = int_to_ptr.vmem [resolvable:$true] %s330
          %333 = dma.hbm_to_vmem [thread:$0]  %s1, 128, %s331, [#allocation10]
        $region16: #{tpu_custom_call.1} parent=11 // pred_fallthru
          _
        // Predicated region
        $region17: #{tpu_custom_call.1} parent=11 // pred_check
          %p334 = pneg %p104
        $region18: #{tpu_custom_call.1} parent=11 // pred_check_branch
          %336 = sbr.rel (%p334) target = $region20
        $region19: #{tpu_custom_call.1} parent=11 // pred_region
          %s338 = ssub.s32 128, 128
          %339 = vsyncadd [#allocation10], %s338
          %s341 = sshll.u32 [#allocation11], 4
          %s342 = int_to_ptr.vmem [resolvable:$true] %s341
          %344 = dma.hbm_to_vmem [thread:$0]  %s2, 128, %s342, [#allocation10]
        $region20: #{tpu_custom_call.1} parent=11 // pred_fallthru
          _
        // Predicated region
        $region21: #{tpu_custom_call.1} parent=11 // pred_check
          %p345 = pneg %p125
        $region22: #{tpu_custom_call.1} parent=11 // pred_check_branch
          %347 = sbr.rel (%p345) target = $region24
        $region23: #{tpu_custom_call.1} parent=11 // pred_region
          _
        $region24: #{tpu_custom_call.1} parent=11 // pred_fallthru
          _
        // Predicated region
        $region25: #{tpu_custom_call.1} parent=11 // pred_check
          %p348 = pneg %p146
        $region26: #{tpu_custom_call.1} parent=11 // pred_check_branch
          %350 = sbr.rel (%p348) target = $region28
        $region27: #{tpu_custom_call.1} parent=11 // pred_region
          _
        $region28: #{tpu_custom_call.1} parent=11 // pred_fallthru
          _
        // Predicated region
        $region29: #{tpu_custom_call.1} parent=11 // pred_check
          %p351 = pneg %p167
        $region30: #{tpu_custom_call.1} parent=11 // pred_check_branch
          %353 = sbr.rel (%p351) target = $region32
        $region31: #{tpu_custom_call.1} parent=11 // pred_region
          _
        $region32: #{tpu_custom_call.1} parent=11 // pred_fallthru
          _
        // Predicated region
        $region33: #{tpu_custom_call.1} parent=11 // pred_check
          %p354 = pneg %p188
        $region34: #{tpu_custom_call.1} parent=11 // pred_check_branch
          %356 = sbr.rel (%p354) target = $region36
        $region35: #{tpu_custom_call.1} parent=11 // pred_region
          _
        $region36: #{tpu_custom_call.1} parent=11 // pred_fallthru
          _
        // Predicated region
        $region37: #{tpu_custom_call.1} parent=11 // pred_check
          %p357 = pneg %p209
        $region38: #{tpu_custom_call.1} parent=11 // pred_check_branch
          %359 = sbr.rel (%p357) target = $region40
        $region39: #{tpu_custom_call.1} parent=11 // pred_region
          _
        $region40: #{tpu_custom_call.1} parent=11 // pred_fallthru
          _
        // Predicated region
        $region41: #{tpu_custom_call.1} parent=11 // pred_check
          %p360 = pneg %p230
        $region42: #{tpu_custom_call.1} parent=11 // pred_check_branch
          %362 = sbr.rel (%p360) target = $region44
        $region43: #{tpu_custom_call.1} parent=11 // pred_region
          _
        $region44: #{tpu_custom_call.1} parent=11 // pred_fallthru
          _
        // Predicated region
        $region45: #{tpu_custom_call.1} parent=11 // pred_check
          %p363 = pneg %p256
        $region46: #{tpu_custom_call.1} parent=11 // pred_check_branch
          %365 = sbr.rel (%p363) target = $region48
        $region47: #{tpu_custom_call.1} parent=11 // pred_region
          %s366 = smul.u32 2, %s34
          %p367 = scmp.lt.s32.totalorder %s366, 1
          %s368 = scalar_select %p367, %s366, 1
          %s369 = smul.addr %s368, 4
          %s370 = scalar_lea.vmem %s9, %s369
          %s371 = smul.u32 2, %s34
        $region48: #{tpu_custom_call.1} parent=11 // pred_fallthru
          _
        // Predicated region
        $region49: #{tpu_custom_call.1} parent=11 // pred_check
          %p372 = pneg %p282
        $region50: #{tpu_custom_call.1} parent=11 // pred_check_branch
          %374 = sbr.rel (%p372) target = $region52
        $region51: #{tpu_custom_call.1} parent=11 // pred_region
          %s375 = smul.u32 32, %s34
          %p376 = scmp.lt.s32.totalorder %s375, 31
          %s377 = scalar_select %p376, %s375, 31
          %s378 = smul.addr %s377, 4
          %s379 = scalar_lea.vmem %s10, %s378
          %s380 = smul.u32 32, %s34
        $region52: #{tpu_custom_call.1} parent=11 // pred_fallthru
          _
      $region12: #{tpu_custom_call.1} parent=5 // pred_fallthru
        _
      %p381 = scmp.lt.s32.totalorder %s24, 2
      // Predicated region
      $region53: #{tpu_custom_call.1} parent=5 // pred_check
        %p382 = pneg %p381
      $region54: #{tpu_custom_call.1} parent=5 // pred_check_branch
        %384 = sbr.rel (%p382) target = $region56
      $region55: #{tpu_custom_call.1} parent=5 // pred_region
        // Predicated region
        $region57: #{tpu_custom_call.1} parent=55 // pred_check
          %p385 = pneg %p56
        $region58: #{tpu_custom_call.1} parent=55 // pred_check_branch
          %387 = sbr.rel (%p385) target = $region60
        $region59: #{tpu_custom_call.1} parent=55 // pred_region
          %s388 = sand.u32 %s46, 1
          %s389 = scalar_lea.sflag [#allocation7], %s388
          %s390 = sand.u32 %s46, 1
          %s391 = smul.addr %s390, 8
          %s392 = scalar_lea.vmem [#allocation6], %s391
          %s394 = ssub.s32 128, 128
          %395 = vsyncadd %s389, %s394
          %s396 = smul.addr %s31, 128
          %s397 = scalar_lea.hbm %s0, %s396
          %s399 = sshll.u32 %s392, 4
          %s400 = int_to_ptr.vmem [resolvable:$true] %s399
          %402 = dma.hbm_to_vmem [thread:$0]  %s397, 128, %s400, %s389
        $region60: #{tpu_custom_call.1} parent=55 // pred_fallthru
          _
      $region56: #{tpu_custom_call.1} parent=5 // pred_fallthru
        _
      %p403 = scmp.le.s32.totalorder 1, %s24
      %p404 = scmp.lt.s32.totalorder %s24, 3
      %p405 = pnand %p403, %p404
      %p406 = pneg %p405
      // Predicated region
      $region61: #{tpu_custom_call.1} parent=5 // pred_check
        _
      $region62: #{tpu_custom_call.1} parent=5 // pred_check_branch
        %408 = sbr.rel (%p405) target = $region64
      $region63: #{tpu_custom_call.1} parent=5 // pred_region
        %s409 = ssub.s32 %s24, 1
        %s410 = sand.u32 %s49, 1
        %s411 = scalar_lea.sflag [#allocation7], %s410
        %s412 = sand.u32 %s49, 1
        %s413 = smul.addr %s412, 8
        %s414 = scalar_lea.vmem [#allocation6], %s413
        // Predicated region
        $region65: #{tpu_custom_call.1} parent=63 // pred_check
          %p415 = pneg %p62
        $region66: #{tpu_custom_call.1} parent=63 // pred_check_branch
          %417 = sbr.rel (%p415) target = $region68
        $region67: #{tpu_custom_call.1} parent=63 // pred_region
          %418 = dma.done %s411, 128
        $region68: #{tpu_custom_call.1} parent=63 // pred_fallthru
          _
        // Predicated region
        $region69: #{tpu_custom_call.1} parent=63 // pred_check
          %p419 = pneg %p83
        $region70: #{tpu_custom_call.1} parent=63 // pred_check_branch
          %421 = sbr.rel (%p419) target = $region72
        $region71: #{tpu_custom_call.1} parent=63 // pred_region
          %422 = dma.done [#allocation10], 128
        $region72: #{tpu_custom_call.1} parent=63 // pred_fallthru
          _
        // Predicated region
        $region73: #{tpu_custom_call.1} parent=63 // pred_check
          %p423 = pneg %p104
        $region74: #{tpu_custom_call.1} parent=63 // pred_check_branch
          %425 = sbr.rel (%p423) target = $region76
        $region75: #{tpu_custom_call.1} parent=63 // pred_region
          %426 = dma.done [#allocation10], 128
        $region76: #{tpu_custom_call.1} parent=63 // pred_fallthru
          _
        %s427 = sand.u32 %s49, 1
        %s428 = scalar_lea.sflag [#allocation7], %s427
        %s429 = sand.u32 %s49, 1
        %s430 = smul.addr %s429, 8
        %s431 = scalar_lea.vmem [#allocation6], %s430
        %p432 = pneg %p62
        %p433 = pneg %p59
        %p434 = pneg %p83
        %p435 = pneg %p80
        %p436 = pneg %p104
        %p437 = pneg %p101
        %p438 = pneg %p125
        %p439 = pneg %p122
        %p440 = pneg %p146
        %p441 = pneg %p143
        %p442 = pneg %p167
        %p443 = pneg %p164
        %p444 = pneg %p188
        %p445 = pneg %p185
        %p446 = pneg %p209
        %p447 = pneg %p206
        %p448 = pneg %p230
        %p449 = pneg %p227
        %s450 = smul.u32 2, %s34
        %p451 = scmp.lt.s32.totalorder %s450, 1
        %s452 = scalar_select %p451, %s450, 1
        %s453 = smul.addr %s452, 4
        %s454 = scalar_lea.vmem %s9, %s453
        %p455 = pneg %p256
        %p456 = pneg %p253
        %s457 = smul.u32 32, %s34
        %p458 = scmp.lt.s32.totalorder %s457, 31
        %s459 = scalar_select %p458, %s457, 31
        %s460 = smul.addr %s459, 4
        %s461 = scalar_lea.vmem %s10, %s460
        %p462 = pneg %p282
        %p463 = pneg %p279
        %p464 = pneg %p308
        %p465 = pneg %p305
        %s466 = sand.u32 %s295, 1
        %s467 = scalar_lea.sflag [#allocation8], %s466
        %s468 = sand.u32 %s295, 1
        %s469 = smul.addr %s468, 8
        %s470 = scalar_lea.vmem [#allocation12], %s469
        %s471 = smul.u32 2, %s34
        %p472 = scmp.lt.s32.totalorder %s471, 1
        %s473 = scalar_select %p472, %s471, 1
        %s474 = smul.addr %s473, 4
        %s475 = scalar_lea.vmem %s9, %s474
        %s476 = smul.u32 2, %s34
        %s477 = smul.u32 32, %s34
        %p478 = scmp.lt.s32.totalorder %s477, 31
        %s479 = scalar_select %p478, %s477, 31
        %s480 = smul.addr %s479, 4
        %s481 = scalar_lea.vmem %s10, %s480
        %s482 = smul.u32 32, %s34
        %p484 = scmp.eq.s32.totalorder %s34, 0
        // Predicated region
        $region77: #{tpu_custom_call.1} parent=63 // pred_check
          %p485 = pneg %p484
        $region78: #{tpu_custom_call.1} parent=63 // pred_check_branch
          %487 = sbr.rel (%p485) target = $region80
        $region79: #{tpu_custom_call.1} parent=63 // pred_region
          %v488 = vld [vmem:[%s414] sm:$0xff]
          %v489 = vld [vmem:[%s7] sm:$0x1]
          %v490 = vmul.f32 %v488, %v488
          %vm491 = vcmask 523264
          %v492 = vsel %vm491, %v490, 0.0
          %493 = vadd.xlane.f32.xlu0 %v492
          %v494 = vpop.xlane.xlu0 %493
          %v495 = vrcp.pop 64.0
          %v496 = vmul.f32 %v494, %v495
          %v497 = vadd.f32 %v496, 1e-06
          %v498 = vrsqrt.pop %v497
          %v499 = vmul.f32 %v488, %v498
          %v501 = vlaneseq
          %v502 = vshrl.u32 %v501, 7
          %v503 = vsub.s32 0, %v502
          %v504 = vrot.slane %v489, %v503
          %v506 = vmul.f32 %v499, %v504
          %v507 = vpack.c.bf16 %v506, %v506
          %v508 = vld [vmem:[%s3] sm:$0xf]
          %v509 = vld [vmem:[%s3 + $0x4] sm:$0xf]
          %v510 = vld [vmem:[%s3 + $0x8] sm:$0xf]
          %v511 = vld [vmem:[%s3 + $0xc] sm:$0xf]
          %v512 = vld [vmem:[%s3 + $0x10] sm:$0xf]
          %v513 = vld [vmem:[%s3 + $0x14] sm:$0xf]
          %v514 = vld [vmem:[%s3 + $0x18] sm:$0xf]
          %v515 = vld [vmem:[%s3 + $0x1c] sm:$0xf]
          %v524 = vunpack.c.l.b16 %v508
          %v525 = vunpack.c.l.b16 %v509
          %v526 = vunpack.c.l.b16 %v510
          %v527 = vunpack.c.l.b16 %v511
          %v528 = vunpack.c.l.b16 %v512
          %v529 = vunpack.c.l.b16 %v513
          %v530 = vunpack.c.l.b16 %v514
          %v531 = vunpack.c.l.b16 %v515
          %v532 = vpack.c.b16 %v525, %v524
          %v533 = vpack.c.b16 %v527, %v526
          %v534 = vpack.c.b16 %v529, %v528
          %v535 = vpack.c.b16 %v531, %v530
          %v541 = vsel %vm491, %v507, 0
          %543 = vmatprep.subr.bf16.mxu0 0
          %544 = vmatpush1.bf16.msra.mxu0 %v532
          %545 = vmatprep.subr.bf16.mxu0 0
          %546 = vmatpush1.bf16.msra.mxu0 %v533
          %547 = vmatprep.subr.bf16.mxu0 0
          %548 = vmatpush1.bf16.msra.mxu0 %v534
          %549 = vmatprep.subr.bf16.mxu0 0
          %550 = vmatpush1.bf16.msra.mxu0 %v535
          %551 = vmatprep.subr.bf16.mxu0 0
          %552 = vmatpush1.bf16.msra.mxu0 0
          %553 = vmatprep.subr.bf16.mxu0 0
          %554 = vmatpush1.bf16.msra.mxu0 0
          %555 = vmatprep.subr.bf16.mxu0 0
          %556 = vmatpush1.bf16.msra.mxu0 0
          %557 = vmatprep.subr.bf16.mxu0 0
          %558 = vmatpush1.bf16.msra.mxu0 0
          %559 = vmatprep.subr.bf16.mxu0 0
          %560 = vmatpush1.bf16.msra.mxu0 0
          %561 = vmatprep.subr.bf16.mxu0 0
          %562 = vmatpush1.bf16.msra.mxu0 0
          %563 = vmatprep.subr.bf16.mxu0 0
          %564 = vmatpush1.bf16.msra.mxu0 0
          %565 = vmatprep.subr.bf16.mxu0 0
          %566 = vmatpush1.bf16.msra.mxu0 0
          %567 = vmatprep.subr.bf16.mxu0 0
          %568 = vmatpush1.bf16.msra.mxu0 0
          %569 = vmatprep.subr.bf16.mxu0 0
          %570 = vmatpush1.bf16.msra.mxu0 0
          %571 = vmatprep.subr.bf16.mxu0 0
          %572 = vmatpush1.bf16.msra.mxu0 0
          %573 = vmatprep.subr.bf16.mxu0 0
          %574 = vmatpush1.bf16.msra.mxu0 0
          %575 = vmatprep.mubr.bf16.mxu0 0
          %576 = vmatmul.mubr.bf16.gmra.mrb[0].mxu0 %v541
          %v577 = vpop.f32.mrb[0].mxu0
          %v578 = vadd.f32 0.0, %v577
          %v579 = vpop.f32.mrb[0].mxu0
          %v580 = vpop.f32.mrb[0].mxu0
          %v581 = vpop.f32.mrb[0].mxu0
          %582 = vdwg.mxu0
          %v583 = vpack.c.bf16 %v578, %v578
          %vm584 = vcmask 125952
          %585 = vst.msk [vmem:[#allocation2] sm:$0xf] %vm584, %v583
          %v587 = vunpack.c.l.b16 %v583
          %v588 = vpack.c.b16 %v587, %v587
          %589 = vrot.lane.b32.xlu0 %v588, 112
          %v590 = vpop.permute.xlu0 %589
          %s592 = scalar_lea.vmem [#allocation2], 4
          %593 = vst.msk [vmem:[%s592] sm:$0xf] %vm584, %v590
          %594 = vrot.lane.b32.xlu0 %v588, 96
          %v595 = vpop.permute.xlu0 %594
          %s597 = scalar_lea.vmem [#allocation2], 8
          %598 = vst.msk [vmem:[%s597] sm:$0xf] %vm584, %v595
          %599 = vrot.lane.b32.xlu0 %v588, 80
          %v600 = vpop.permute.xlu0 %599
          %s602 = scalar_lea.vmem [#allocation2], 12
          %603 = vst.msk [vmem:[%s602] sm:$0xf] %vm584, %v600
          %v604 = vld [vmem:[%s4] sm:$0xf]
          %v605 = vld [vmem:[%s4 + $0x4] sm:$0xf]
          %v606 = vld [vmem:[%s4 + $0x8] sm:$0xf]
          %v607 = vld [vmem:[%s4 + $0xc] sm:$0xf]
          %v608 = vld [vmem:[%s4 + $0x10] sm:$0xf]
          %v609 = vld [vmem:[%s4 + $0x14] sm:$0xf]
          %v610 = vld [vmem:[%s4 + $0x18] sm:$0xf]
          %v611 = vld [vmem:[%s4 + $0x1c] sm:$0xf]
          %v620 = vunpack.c.l.b16 %v604
          %v621 = vunpack.c.l.b16 %v605
          %v622 = vunpack.c.l.b16 %v606
          %v623 = vunpack.c.l.b16 %v607
          %v624 = vunpack.c.l.b16 %v608
          %v625 = vunpack.c.l.b16 %v609
          %v626 = vunpack.c.l.b16 %v610
          %v627 = vunpack.c.l.b16 %v611
          %v628 = vpack.c.b16 %v621, %v620
          %v629 = vpack.c.b16 %v623, %v622
          %v630 = vpack.c.b16 %v625, %v624
          %v631 = vpack.c.b16 %v627, %v626
          %636 = vmatprep.subr.bf16.mxu0 0
          %637 = vmatpush1.bf16.msra.mxu0 %v628
          %638 = vmatprep.subr.bf16.mxu0 0
          %639 = vmatpush1.bf16.msra.mxu0 %v629
          %640 = vmatprep.subr.bf16.mxu0 0
          %641 = vmatpush1.bf16.msra.mxu0 %v630
          %642 = vmatprep.subr.bf16.mxu0 0
          %643 = vmatpush1.bf16.msra.mxu0 %v631
          %644 = vmatprep.subr.bf16.mxu0 0
          %645 = vmatpush1.bf16.msra.mxu0 0
          %646 = vmatprep.subr.bf16.mxu0 0
          %647 = vmatpush1.bf16.msra.mxu0 0
          %648 = vmatprep.subr.bf16.mxu0 0
          %649 = vmatpush1.bf16.msra.mxu0 0
          %650 = vmatprep.subr.bf16.mxu0 0
          %651 = vmatpush1.bf16.msra.mxu0 0
          %652 = vmatprep.subr.bf16.mxu0 0
          %653 = vmatpush1.bf16.msra.mxu0 0
          %654 = vmatprep.subr.bf16.mxu0 0
          %655 = vmatpush1.bf16.msra.mxu0 0
          %656 = vmatprep.subr.bf16.mxu0 0
          %657 = vmatpush1.bf16.msra.mxu0 0
          %658 = vmatprep.subr.bf16.mxu0 0
          %659 = vmatpush1.bf16.msra.mxu0 0
          %660 = vmatprep.subr.bf16.mxu0 0
          %661 = vmatpush1.bf16.msra.mxu0 0
          %662 = vmatprep.subr.bf16.mxu0 0
          %663 = vmatpush1.bf16.msra.mxu0 0
          %664 = vmatprep.subr.bf16.mxu0 0
          %665 = vmatpush1.bf16.msra.mxu0 0
          %666 = vmatprep.subr.bf16.mxu0 0
          %667 = vmatpush1.bf16.msra.mxu0 0
          %668 = vmatprep.mubr.bf16.mxu0 0
          %669 = vmatmul.mubr.bf16.gmra.mrb[0].mxu0 %v541
          %v670 = vpop.f32.mrb[0].mxu0
          %v671 = vadd.f32 0.0, %v670
          %v672 = vpop.f32.mrb[0].mxu0
          %v673 = vpop.f32.mrb[0].mxu0
          %v674 = vpop.f32.mrb[0].mxu0
          %675 = vdwg.mxu0
          %v676 = vpack.c.bf16 %v671, %v671
          %677 = vst.msk [vmem:[#allocation3] sm:$0xf] %vm584, %v676
          %v679 = vunpack.c.l.b16 %v676
          %v680 = vpack.c.b16 %v679, %v679
          %681 = vrot.lane.b32.xlu0 %v680, 112
          %v682 = vpop.permute.xlu0 %681
          %s684 = scalar_lea.vmem [#allocation3], 4
          %685 = vst.msk [vmem:[%s684] sm:$0xf] %vm584, %v682
          %686 = vrot.lane.b32.xlu0 %v680, 96
          %v687 = vpop.permute.xlu0 %686
          %s689 = scalar_lea.vmem [#allocation3], 8
          %690 = vst.msk [vmem:[%s689] sm:$0xf] %vm584, %v687
          %691 = vrot.lane.b32.xlu0 %v680, 80
          %v692 = vpop.permute.xlu0 %691
          %s694 = scalar_lea.vmem [#allocation3], 12
          %695 = vst.msk [vmem:[%s694] sm:$0xf] %vm584, %v692
          %v696 = vld [vmem:[%s5] sm:$0xf]
          %v697 = vld [vmem:[%s5 + $0x4] sm:$0xf]
          %v698 = vld [vmem:[%s5 + $0x8] sm:$0xf]
          %v699 = vld [vmem:[%s5 + $0xc] sm:$0xf]
          %v700 = vld [vmem:[%s5 + $0x10] sm:$0xf]
          %v701 = vld [vmem:[%s5 + $0x14] sm:$0xf]
          %v702 = vld [vmem:[%s5 + $0x18] sm:$0xf]
          %v703 = vld [vmem:[%s5 + $0x1c] sm:$0xf]
          %v712 = vunpack.c.l.b16 %v696
          %v713 = vunpack.c.l.b16 %v697
          %v714 = vunpack.c.l.b16 %v698
          %v715 = vunpack.c.l.b16 %v699
          %v716 = vunpack.c.l.b16 %v700
          %v717 = vunpack.c.l.b16 %v701
          %v718 = vunpack.c.l.b16 %v702
          %v719 = vunpack.c.l.b16 %v703
          %v720 = vpack.c.b16 %v713, %v712
          %v721 = vpack.c.b16 %v715, %v714
          %v722 = vpack.c.b16 %v717, %v716
          %v723 = vpack.c.b16 %v719, %v718
          %728 = vmatprep.subr.bf16.mxu0 0
          %729 = vmatpush1.bf16.msra.mxu0 %v720
          %730 = vmatprep.subr.bf16.mxu0 0
          %731 = vmatpush1.bf16.msra.mxu0 %v721
          %732 = vmatprep.subr.bf16.mxu0 0
          %733 = vmatpush1.bf16.msra.mxu0 %v722
          %734 = vmatprep.subr.bf16.mxu0 0
          %735 = vmatpush1.bf16.msra.mxu0 %v723
          %736 = vmatprep.subr.bf16.mxu0 0
          %737 = vmatpush1.bf16.msra.mxu0 0
          %738 = vmatprep.subr.bf16.mxu0 0
          %739 = vmatpush1.bf16.msra.mxu0 0
          %740 = vmatprep.subr.bf16.mxu0 0
          %741 = vmatpush1.bf16.msra.mxu0 0
          %742 = vmatprep.subr.bf16.mxu0 0
          %743 = vmatpush1.bf16.msra.mxu0 0
          %744 = vmatprep.subr.bf16.mxu0 0
          %745 = vmatpush1.bf16.msra.mxu0 0
          %746 = vmatprep.subr.bf16.mxu0 0
          %747 = vmatpush1.bf16.msra.mxu0 0
          %748 = vmatprep.subr.bf16.mxu0 0
          %749 = vmatpush1.bf16.msra.mxu0 0
          %750 = vmatprep.subr.bf16.mxu0 0
          %751 = vmatpush1.bf16.msra.mxu0 0
          %752 = vmatprep.subr.bf16.mxu0 0
          %753 = vmatpush1.bf16.msra.mxu0 0
          %754 = vmatprep.subr.bf16.mxu0 0
          %755 = vmatpush1.bf16.msra.mxu0 0
          %756 = vmatprep.subr.bf16.mxu0 0
          %757 = vmatpush1.bf16.msra.mxu0 0
          %758 = vmatprep.subr.bf16.mxu0 0
          %759 = vmatpush1.bf16.msra.mxu0 0
          %760 = vmatprep.mubr.bf16.mxu0 0
          %761 = vmatmul.mubr.bf16.gmra.mrb[0].mxu0 %v541
          %v762 = vpop.f32.mrb[0].mxu0
          %v763 = vadd.f32 0.0, %v762
          %v764 = vpop.f32.mrb[0].mxu0
          %v765 = vpop.f32.mrb[0].mxu0
          %v766 = vpop.f32.mrb[0].mxu0
          %767 = vdwg.mxu0
          %v768 = vpack.c.bf16 %v763, %v763
          %769 = vst.msk [vmem:[#allocation4] sm:$0xf] %vm584, %v768
          %v771 = vunpack.c.l.b16 %v768
          %v772 = vpack.c.b16 %v771, %v771
          %773 = vrot.lane.b32.xlu0 %v772, 112
          %v774 = vpop.permute.xlu0 %773
          %s776 = scalar_lea.vmem [#allocation4], 4
          %777 = vst.msk [vmem:[%s776] sm:$0xf] %vm584, %v774
          %778 = vrot.lane.b32.xlu0 %v772, 96
          %v779 = vpop.permute.xlu0 %778
          %s781 = scalar_lea.vmem [#allocation4], 8
          %782 = vst.msk [vmem:[%s781] sm:$0xf] %vm584, %v779
          %783 = vrot.lane.b32.xlu0 %v772, 80
          %v784 = vpop.permute.xlu0 %783
          %s786 = scalar_lea.vmem [#allocation4], 12
          %787 = vst.msk [vmem:[%s786] sm:$0xf] %vm584, %v784
          %788 = vst.msk [vmem:[%s470] sm:$0xff] %vm491, %v488
          loop: start=0, step=1, limit=4
          $region81: #{tpu_custom_call.1} parent=79 // loop_pre_header
            _
          $region82: #{tpu_custom_call.1} parent=79 // loop_header
            %s790 = sphi 0, %s794
            %p791 = scmp.ge.s32.totalorder %s790, 4
          $region83: #{tpu_custom_call.1} parent=79 // loop_header_branch
            %793 = sbr.rel (%p791) target = $region87
          $region84: #{tpu_custom_call.1} parent=79 // loop_body
            %v795 = vld [vmem:[#allocation9] sm:$0xff]
            %v796 = vld [vmem:[#allocation11] sm:$0xff]
            %s797 = smul.addr %s790, 4
            %s798 = scalar_lea.vmem [#allocation2], %s797
            %v799 = vld [vmem:[%s798] sm:$0xf]
            %v800 = vunpack.c.l.bf16 %v799
            %s801 = smul.addr %s790, 4
            %s802 = scalar_lea.vmem [#allocation3], %s801
            %v803 = vld [vmem:[%s802] sm:$0xf]
            %v804 = vunpack.c.l.bf16 %v803
            %v805 = vmul.f32 %v800, %v795
            %807 = vrot.lane.b32.xlu0 %v800, 120
            %v808 = vpop.permute.xlu0 %807
            %810 = vrot.lane.b32.xlu0 %v800, 8
            %v811 = vpop.permute.xlu0 %810
            %vm813 = vcmask 64512
            %v814 = vsel %vm813, %v808, %v811
            %v815 = vmul.f32 %v814, %v796
            %v816 = vadd.f32 %v805, %v815
            %v817 = vpack.c.bf16 %v816, %v816
            %v818 = vmul.f32 %v804, %v795
            %820 = vrot.lane.b32.xlu0 %v804, 120
            %v821 = vpop.permute.xlu0 %820
            %823 = vrot.lane.b32.xlu0 %v804, 8
            %v824 = vpop.permute.xlu0 %823
            %v826 = vsel %vm813, %v821, %v824
            %v827 = vmul.f32 %v826, %v796
            %v828 = vadd.f32 %v818, %v827
            %v829 = vpack.c.bf16 %v828, %v828
            %vm830 = vcmask 130048
            %v832 = vsel %vm830, %v817, 0
            %v835 = vsel %vm830, %v829, 0
            %837 = vmatprep.subr.bf16.mxu0 0
            %838 = vmatpush1.bf16.xpose.msra.mxu0 %v835
            %839 = vmatprep.subr.bf16.mxu0 0
            %840 = vmatpush1.bf16.xpose.msra.mxu0 0
            %841 = vmatprep.subr.bf16.mxu0 0
            %842 = vmatpush1.bf16.xpose.msra.mxu0 0
            %843 = vmatprep.subr.bf16.mxu0 0
            %844 = vmatpush1.bf16.xpose.msra.mxu0 0
            %845 = vmatprep.subr.bf16.mxu0 0
            %846 = vmatpush1.bf16.xpose.msra.mxu0 0
            %847 = vmatprep.subr.bf16.mxu0 0
            %848 = vmatpush1.bf16.xpose.msra.mxu0 0
            %849 = vmatprep.subr.bf16.mxu0 0
            %850 = vmatpush1.bf16.xpose.msra.mxu0 0
            %851 = vmatprep.subr.bf16.mxu0 0
            %852 = vmatpush1.bf16.xpose.msra.mxu0 0
            %853 = vmatprep.subr.bf16.mxu0 0
            %854 = vmatpush1.bf16.xpose.msra.mxu0 0
            %855 = vmatprep.subr.bf16.mxu0 0
            %856 = vmatpush1.bf16.xpose.msra.mxu0 0
            %857 = vmatprep.subr.bf16.mxu0 0
            %858 = vmatpush1.bf16.xpose.msra.mxu0 0
            %859 = vmatprep.subr.bf16.mxu0 0
            %860 = vmatpush1.bf16.xpose.msra.mxu0 0
            %861 = vmatprep.subr.bf16.mxu0 0
            %862 = vmatpush1.bf16.xpose.msra.mxu0 0
            %863 = vmatprep.subr.bf16.mxu0 0
            %864 = vmatpush1.bf16.xpose.msra.mxu0 0
            %865 = vmatprep.subr.bf16.mxu0 0
            %866 = vmatpush1.bf16.xpose.msra.mxu0 0
            %867 = vmatprep.subr.bf16.mxu0 0
            %868 = vmatpush1.bf16.xpose.msra.mxu0 0
            %869 = vmatprep.mubr.bf16.mxu0 0
            %870 = vmatmul.mubr.bf16.gmra.mrb[0].mxu0 %v832
            %v871 = vpop.f32.mrb[0].mxu0
            %v872 = vadd.f32 0.0, %v871
            %v873 = vpop.f32.mrb[0].mxu0
            %v874 = vpop.f32.mrb[0].mxu0
            %v875 = vpop.f32.mrb[0].mxu0
            %876 = vdwg.mxu0
            %v877 = vsel %vm813, %v872, -inf
            %878 = vmax.xlane.f32.xlu0 %v877
            %v879 = vpop.xlane.xlu0 %878
            %v880 = vsub.f32 %v872, %v879
            %v881 = vmul.f32 %v880, 1.442695
            %v882 = vpow.pop %v881
            %v883 = vsel %vm813, %v882, 0.0
            %884 = vadd.xlane.f32.xlu0 %v883
            %v885 = vpop.xlane.xlu0 %884
            %v886 = vrcp.pop %v885
            %v887 = vmul.f32 %v882, %v886
            %v888 = vpack.c.bf16 %v887, %v887
            %s889 = smul.addr %s790, 4
            %s890 = scalar_lea.vmem [#allocation4], %s889
            %v891 = vld [vmem:[%s890] sm:$0xf]
            %v893 = vsel %vm813, %v888, 0
            %vm895 = vcmask 1043456
            %v897 = vsel %vm895, %v891, 0
            %899 = vmatprep.subr.bf16.mxu0 0
            %900 = vmatpush1.bf16.msra.mxu0 %v897
            %901 = vmatprep.subr.bf16.mxu0 0
            %902 = vmatpush1.bf16.msra.mxu0 0
            %903 = vmatprep.subr.bf16.mxu0 0
            %904 = vmatpush1.bf16.msra.mxu0 0
            %905 = vmatprep.subr.bf16.mxu0 0
            %906 = vmatpush1.bf16.msra.mxu0 0
            %907 = vmatprep.subr.bf16.mxu0 0
            %908 = vmatpush1.bf16.msra.mxu0 0
            %909 = vmatprep.subr.bf16.mxu0 0
            %910 = vmatpush1.bf16.msra.mxu0 0
            %911 = vmatprep.subr.bf16.mxu0 0
            %912 = vmatpush1.bf16.msra.mxu0 0
            %913 = vmatprep.subr.bf16.mxu0 0
            %914 = vmatpush1.bf16.msra.mxu0 0
            %915 = vmatprep.subr.bf16.mxu0 0
            %916 = vmatpush1.bf16.msra.mxu0 0
            %917 = vmatprep.subr.bf16.mxu0 0
            %918 = vmatpush1.bf16.msra.mxu0 0
            %919 = vmatprep.subr.bf16.mxu0 0
            %920 = vmatpush1.bf16.msra.mxu0 0
            %921 = vmatprep.subr.bf16.mxu0 0
            %922 = vmatpush1.bf16.msra.mxu0 0
            %923 = vmatprep.subr.bf16.mxu0 0
            %924 = vmatpush1.bf16.msra.mxu0 0
            %925 = vmatprep.subr.bf16.mxu0 0
            %926 = vmatpush1.bf16.msra.mxu0 0
            %927 = vmatprep.subr.bf16.mxu0 0
            %928 = vmatpush1.bf16.msra.mxu0 0
            %929 = vmatprep.subr.bf16.mxu0 0
            %930 = vmatpush1.bf16.msra.mxu0 0
            %931 = vmatprep.mubr.bf16.mxu0 0
            %932 = vmatmul.mubr.bf16.gmra.mrb[0].mxu0 %v893
            %v933 = vpop.f32.mrb[0].mxu0
            %v934 = vadd.f32 0.0, %v933
            %v935 = vpop.f32.mrb[0].mxu0
            %v936 = vpop.f32.mrb[0].mxu0
            %v937 = vpop.f32.mrb[0].mxu0
            %938 = vdwg.mxu0
            %v939 = vld [vmem:[%s470] sm:$0xff]
            %v940 = vpack.c.bf16 %v934, %v934
            %s941 = smul.u32 %s790, 2
            %s942 = smul.addr %s941, 4
            %s943 = scalar_lea.vmem %s6, %s942
            %v944 = vld [vmem:[%s943] sm:$0xf]
            %v945 = vld [vmem:[%s943 + $0x4] sm:$0xf]
            %v948 = vunpack.c.l.b16 %v944
            %v949 = vunpack.c.l.b16 %v945
            %v950 = vpack.c.b16 %v949, %v948
            %v953 = vsel %vm830, %v940, 0
            %955 = vmatprep.subr.bf16.mxu0 0
            %956 = vmatpush1.bf16.msra.mxu0 %v950
            %957 = vmatprep.subr.bf16.mxu0 0
            %958 = vmatpush1.bf16.msra.mxu0 0
            %959 = vmatprep.subr.bf16.mxu0 0
            %960 = vmatpush1.bf16.msra.mxu0 0
            %961 = vmatprep.subr.bf16.mxu0 0
            %962 = vmatpush1.bf16.msra.mxu0 0
            %963 = vmatprep.subr.bf16.mxu0 0
            %964 = vmatpush1.bf16.msra.mxu0 0
            %965 = vmatprep.subr.bf16.mxu0 0
            %966 = vmatpush1.bf16.msra.mxu0 0
            %967 = vmatprep.subr.bf16.mxu0 0
            %968 = vmatpush1.bf16.msra.mxu0 0
            %969 = vmatprep.subr.bf16.mxu0 0
            %970 = vmatpush1.bf16.msra.mxu0 0
            %971 = vmatprep.subr.bf16.mxu0 0
            %972 = vmatpush1.bf16.msra.mxu0 0
            %973 = vmatprep.subr.bf16.mxu0 0
            %974 = vmatpush1.bf16.msra.mxu0 0
            %975 = vmatprep.subr.bf16.mxu0 0
            %976 = vmatpush1.bf16.msra.mxu0 0
            %977 = vmatprep.subr.bf16.mxu0 0
            %978 = vmatpush1.bf16.msra.mxu0 0
            %979 = vmatprep.subr.bf16.mxu0 0
            %980 = vmatpush1.bf16.msra.mxu0 0
            %981 = vmatprep.subr.bf16.mxu0 0
            %982 = vmatpush1.bf16.msra.mxu0 0
            %983 = vmatprep.subr.bf16.mxu0 0
            %984 = vmatpush1.bf16.msra.mxu0 0
            %985 = vmatprep.subr.bf16.mxu0 0
            %986 = vmatpush1.bf16.msra.mxu0 0
            %987 = vmatprep.mubr.bf16.mxu0 0
            %988 = vmatmul.mubr.bf16.gmra.mrb[0].mxu0 %v953
            %v989 = vpop.f32.mrb[0].mxu0
            %v990 = vadd.f32 0.0, %v989
            %v991 = vpop.f32.mrb[0].mxu0
            %v992 = vpop.f32.mrb[0].mxu0
            %v993 = vpop.f32.mrb[0].mxu0
            %994 = vdwg.mxu0
            %v995 = vadd.f32 %v939, %v990
            %996 = vst.msk [vmem:[%s470] sm:$0xff] %vm491, %v995
          $region85: #{tpu_custom_call.1} parent=79 // loop_footer
            %s794 = sadd.s32 1, %s790
          $region86: #{tpu_custom_call.1} parent=79 // loop_footer_branch
            %789 = sbr.rel target = $region82
          $region87: #{tpu_custom_call.1} parent=79 // loop_exit
            _
          %v997 = vld [vmem:[%s470] sm:$0xff]
          %v998 = vld [vmem:[%s8] sm:$0x1]
          %v999 = vmul.f32 %v997, %v997
          %v1000 = vsel %vm491, %v999, 0.0
          %1001 = vadd.xlane.f32.xlu0 %v1000
          %v1002 = vpop.xlane.xlu0 %1001
          %v1003 = vmul.f32 %v1002, %v495
          %v1004 = vadd.f32 %v1003, 1e-06
          %v1005 = vrsqrt.pop %v1004
          %v1006 = vmul.f32 %v997, %v1005
          %v1008 = vlaneseq
          %v1009 = vshrl.u32 %v1008, 7
          %v1010 = vsub.s32 0, %v1009
          %v1011 = vrot.slane %v998, %v1010
          %v1013 = vmul.f32 %v1006, %v1011
          %v1014 = vpack.c.bf16 %v1013, %v1013
          %vm1015 = vcmask 519168
          %1016 = vst.msk [vmem:[#allocation5] sm:$0xf] %vm1015, %v1014
        $region80: #{tpu_custom_call.1} parent=63 // pred_fallthru
          _
        %v1017 = vld [vmem:[#allocation5] sm:$0xf]
        %v1018 = vld [vmem:[%s475] sm:$0xff]
        %v1019 = vld [vmem:[%s475 + $0x8] sm:$0xff]
        %v1020 = vld [vmem:[%s475 + $0x10] sm:$0xff]
        %v1021 = vld [vmem:[%s475 + $0x18] sm:$0xff]
        %v1022 = vld [vmem:[%s475 + $0x20] sm:$0xff]
        %v1023 = vld [vmem:[%s475 + $0x28] sm:$0xff]
        %v1024 = vld [vmem:[%s475 + $0x30] sm:$0xff]
        %v1025 = vld [vmem:[%s475 + $0x38] sm:$0xff]
        %v1034 = vunpack.c.l.b16 %v1018
        %v1035 = vunpack.c.h.b16 %v1018
        %v1036 = vunpack.c.l.b16 %v1019
        %v1037 = vunpack.c.h.b16 %v1019
        %v1038 = vunpack.c.l.b16 %v1020
        %v1039 = vunpack.c.h.b16 %v1020
        %v1040 = vunpack.c.l.b16 %v1021
        %v1041 = vunpack.c.h.b16 %v1021
        %v1042 = vunpack.c.l.b16 %v1022
        %v1043 = vunpack.c.h.b16 %v1022
        %v1044 = vunpack.c.l.b16 %v1023
        %v1045 = vunpack.c.h.b16 %v1023
        %v1046 = vunpack.c.l.b16 %v1024
        %v1047 = vunpack.c.h.b16 %v1024
        %v1048 = vunpack.c.l.b16 %v1025
        %v1049 = vunpack.c.h.b16 %v1025
        %v1050 = vpack.c.b16 %v1036, %v1034
        %v1051 = vpack.c.b16 %v1037, %v1035
        %v1052 = vpack.c.b16 %v1040, %v1038
        %v1053 = vpack.c.b16 %v1041, %v1039
        %v1054 = vpack.c.b16 %v1044, %v1042
        %v1055 = vpack.c.b16 %v1045, %v1043
        %v1056 = vpack.c.b16 %v1048, %v1046
        %v1057 = vpack.c.b16 %v1049, %v1047
        %vm1066 = vcmask 523264
        %v1068 = vsel %vm1066, %v1017, 0
        %1070 = vmatprep.subr.bf16.mxu0 %v1051
        %1071 = vmatpush1.bf16.msra.mxu0 %v1050
        %1072 = vmatprep.subr.bf16.mxu0 %v1053
        %1073 = vmatpush1.bf16.msra.mxu0 %v1052
        %1074 = vmatprep.subr.bf16.mxu0 %v1055
        %1075 = vmatpush1.bf16.msra.mxu0 %v1054
        %1076 = vmatprep.subr.bf16.mxu0 %v1057
        %1077 = vmatpush1.bf16.msra.mxu0 %v1056
        %1078 = vmatprep.subr.bf16.mxu0 0
        %1079 = vmatpush1.bf16.msra.mxu0 0
        %1080 = vmatprep.subr.bf16.mxu0 0
        %1081 = vmatpush1.bf16.msra.mxu0 0
        %1082 = vmatprep.subr.bf16.mxu0 0
        %1083 = vmatpush1.bf16.msra.mxu0 0
        %1084 = vmatprep.subr.bf16.mxu0 0
        %1085 = vmatpush1.bf16.msra.mxu0 0
        %1086 = vmatprep.subr.bf16.mxu0 0
        %1087 = vmatpush1.bf16.msra.mxu0 0
        %1088 = vmatprep.subr.bf16.mxu0 0
        %1089 = vmatpush1.bf16.msra.mxu0 0
        %1090 = vmatprep.subr.bf16.mxu0 0
        %1091 = vmatpush1.bf16.msra.mxu0 0
        %1092 = vmatprep.subr.bf16.mxu0 0
        %1093 = vmatpush1.bf16.msra.mxu0 0
        %1094 = vmatprep.subr.bf16.mxu0 0
        %1095 = vmatpush1.bf16.msra.mxu0 0
        %1096 = vmatprep.subr.bf16.mxu0 0
        %1097 = vmatpush1.bf16.msra.mxu0 0
        %1098 = vmatprep.subr.bf16.mxu0 0
        %1099 = vmatpush1.bf16.msra.mxu0 0
        %1100 = vmatprep.subr.bf16.mxu0 0
        %1101 = vmatpush1.bf16.msra.mxu0 0
        %1102 = vmatprep.mubr.bf16.mxu0 0
        %1103 = vmatmul.mubr.bf16.gmra.mrb[0].mxu0 %v1068
        %v1104 = vpop.f32.mrb[0].mxu0
        %v1105 = vadd.f32 0.0, %v1104
        %v1106 = vpop.f32.mrb[0].mxu0
        %v1107 = vadd.f32 0.0, %v1106
        %v1108 = vpop.f32.mrb[0].mxu0
        %v1109 = vpop.f32.mrb[0].mxu0
        %1110 = vdwg.mxu0
        %v1111 = vxor.u32 %v1105, 2147483648
        %v1112 = vxor.u32 %v1107, 2147483648
        %v1113 = vmul.f32 %v1111, 1.442695
        %v1114 = vpow.pop %v1113
        %v1115 = vmul.f32 %v1112, 1.442695
        %v1116 = vpow.pop %v1115
        %v1117 = vadd.f32 %v1114, 1.0
        %v1118 = vadd.f32 %v1116, 1.0
        %v1119 = vrcp.pop %v1117
        %v1120 = vmul.f32 1.0, %v1119
        %v1121 = vrcp.pop %v1118
        %v1122 = vmul.f32 1.0, %v1121
        %v1123 = vmul.f32 %v1105, %v1120
        %v1124 = vmul.f32 %v1107, %v1122
        %v1125 = vld [vmem:[%s470] sm:$0xff]
        %v1126 = vpack.c.bf16 %v1123, %v1123
        %v1127 = vpack.c.bf16 %v1124, %v1124
        %v1128 = vld [vmem:[%s481] sm:$0xf]
        %v1129 = vld [vmem:[%s481 + $0x4] sm:$0xf]
        %v1130 = vld [vmem:[%s481 + $0x8] sm:$0xf]
        %v1131 = vld [vmem:[%s481 + $0xc] sm:$0xf]
        %v1132 = vld [vmem:[%s481 + $0x10] sm:$0xf]
        %v1133 = vld [vmem:[%s481 + $0x14] sm:$0xf]
        %v1134 = vld [vmem:[%s481 + $0x18] sm:$0xf]
        %v1135 = vld [vmem:[%s481 + $0x1c] sm:$0xf]
        %v1136 = vld [vmem:[%s481 + $0x20] sm:$0xf]
        %v1137 = vld [vmem:[%s481 + $0x24] sm:$0xf]
        %v1138 = vld [vmem:[%s481 + $0x28] sm:$0xf]
        %v1139 = vld [vmem:[%s481 + $0x2c] sm:$0xf]
        %v1140 = vld [vmem:[%s481 + $0x30] sm:$0xf]
        %v1141 = vld [vmem:[%s481 + $0x34] sm:$0xf]
        %v1142 = vld [vmem:[%s481 + $0x38] sm:$0xf]
        %v1143 = vld [vmem:[%s481 + $0x3c] sm:$0xf]
        %v1144 = vld [vmem:[%s481 + $0x40] sm:$0xf]
        %v1145 = vld [vmem:[%s481 + $0x44] sm:$0xf]
        %v1146 = vld [vmem:[%s481 + $0x48] sm:$0xf]
        %v1147 = vld [vmem:[%s481 + $0x4c] sm:$0xf]
        %v1148 = vld [vmem:[%s481 + $0x50] sm:$0xf]
        %v1149 = vld [vmem:[%s481 + $0x54] sm:$0xf]
        %v1150 = vld [vmem:[%s481 + $0x58] sm:$0xf]
        %v1151 = vld [vmem:[%s481 + $0x5c] sm:$0xf]
        %v1152 = vld [vmem:[%s481 + $0x60] sm:$0xf]
        %v1153 = vld [vmem:[%s481 + $0x64] sm:$0xf]
        %v1154 = vld [vmem:[%s481 + $0x68] sm:$0xf]
        %v1155 = vld [vmem:[%s481 + $0x6c] sm:$0xf]
        %v1156 = vld [vmem:[%s481 + $0x70] sm:$0xf]
        %v1157 = vld [vmem:[%s481 + $0x74] sm:$0xf]
        %v1158 = vld [vmem:[%s481 + $0x78] sm:$0xf]
        %v1159 = vld [vmem:[%s481 + $0x7c] sm:$0xf]
        %v1192 = vunpack.c.l.b16 %v1128
        %v1193 = vunpack.c.l.b16 %v1129
        %v1194 = vunpack.c.l.b16 %v1130
        %v1195 = vunpack.c.l.b16 %v1131
        %v1196 = vunpack.c.l.b16 %v1132
        %v1197 = vunpack.c.l.b16 %v1133
        %v1198 = vunpack.c.l.b16 %v1134
        %v1199 = vunpack.c.l.b16 %v1135
        %v1200 = vunpack.c.l.b16 %v1136
        %v1201 = vunpack.c.l.b16 %v1137
        %v1202 = vunpack.c.l.b16 %v1138
        %v1203 = vunpack.c.l.b16 %v1139
        %v1204 = vunpack.c.l.b16 %v1140
        %v1205 = vunpack.c.l.b16 %v1141
        %v1206 = vunpack.c.l.b16 %v1142
        %v1207 = vunpack.c.l.b16 %v1143
        %v1208 = vunpack.c.l.b16 %v1144
        %v1209 = vunpack.c.l.b16 %v1145
        %v1210 = vunpack.c.l.b16 %v1146
        %v1211 = vunpack.c.l.b16 %v1147
        %v1212 = vunpack.c.l.b16 %v1148
        %v1213 = vunpack.c.l.b16 %v1149
        %v1214 = vunpack.c.l.b16 %v1150
        %v1215 = vunpack.c.l.b16 %v1151
        %v1216 = vunpack.c.l.b16 %v1152
        %v1217 = vunpack.c.l.b16 %v1153
        %v1218 = vunpack.c.l.b16 %v1154
        %v1219 = vunpack.c.l.b16 %v1155
        %v1220 = vunpack.c.l.b16 %v1156
        %v1221 = vunpack.c.l.b16 %v1157
        %v1222 = vunpack.c.l.b16 %v1158
        %v1223 = vunpack.c.l.b16 %v1159
        %v1224 = vpack.c.b16 %v1193, %v1192
        %v1225 = vpack.c.b16 %v1195, %v1194
        %v1226 = vpack.c.b16 %v1197, %v1196
        %v1227 = vpack.c.b16 %v1199, %v1198
        %v1228 = vpack.c.b16 %v1201, %v1200
        %v1229 = vpack.c.b16 %v1203, %v1202
        %v1230 = vpack.c.b16 %v1205, %v1204
        %v1231 = vpack.c.b16 %v1207, %v1206
        %v1232 = vpack.c.b16 %v1209, %v1208
        %v1233 = vpack.c.b16 %v1211, %v1210
        %v1234 = vpack.c.b16 %v1213, %v1212
        %v1235 = vpack.c.b16 %v1215, %v1214
        %v1236 = vpack.c.b16 %v1217, %v1216
        %v1237 = vpack.c.b16 %v1219, %v1218
        %v1238 = vpack.c.b16 %v1221, %v1220
        %v1239 = vpack.c.b16 %v1223, %v1222
        %1256 = vmatprep.subr.bf16.mxu0 0
        %1257 = vmatpush1.bf16.msra.mxu0 %v1224
        %1258 = vmatprep.subr.bf16.mxu0 0
        %1259 = vmatpush1.bf16.msra.mxu0 %v1225
        %1260 = vmatprep.subr.bf16.mxu0 0
        %1261 = vmatpush1.bf16.msra.mxu0 %v1226
        %1262 = vmatprep.subr.bf16.mxu0 0
        %1263 = vmatpush1.bf16.msra.mxu0 %v1227
        %1264 = vmatprep.subr.bf16.mxu0 0
        %1265 = vmatpush1.bf16.msra.mxu0 %v1228
        %1266 = vmatprep.subr.bf16.mxu0 0
        %1267 = vmatpush1.bf16.msra.mxu0 %v1229
        %1268 = vmatprep.subr.bf16.mxu0 0
        %1269 = vmatpush1.bf16.msra.mxu0 %v1230
        %1270 = vmatprep.subr.bf16.mxu0 0
        %1271 = vmatpush1.bf16.msra.mxu0 %v1231
        %1272 = vmatprep.subr.bf16.mxu0 0
        %1273 = vmatpush1.bf16.msra.mxu0 %v1232
        %1274 = vmatprep.subr.bf16.mxu0 0
        %1275 = vmatpush1.bf16.msra.mxu0 %v1233
        %1276 = vmatprep.subr.bf16.mxu0 0
        %1277 = vmatpush1.bf16.msra.mxu0 %v1234
        %1278 = vmatprep.subr.bf16.mxu0 0
        %1279 = vmatpush1.bf16.msra.mxu0 %v1235
        %1280 = vmatprep.subr.bf16.mxu0 0
        %1281 = vmatpush1.bf16.msra.mxu0 %v1236
        %1282 = vmatprep.subr.bf16.mxu0 0
        %1283 = vmatpush1.bf16.msra.mxu0 %v1237
        %1284 = vmatprep.subr.bf16.mxu0 0
        %1285 = vmatpush1.bf16.msra.mxu0 %v1238
        %1286 = vmatprep.subr.bf16.mxu0 0
        %1287 = vmatpush1.bf16.msra.mxu0 %v1239
        %1288 = vmatprep.mubr.bf16.mxu0 %v1127
        %1289 = vmatmul.mubr.bf16.gmra.mrb[0].mxu0 %v1126
        %v1290 = vpop.f32.mrb[0].mxu0
        %v1291 = vadd.f32 0.0, %v1290
        %v1292 = vpop.f32.mrb[0].mxu0
        %v1293 = vpop.f32.mrb[0].mxu0
        %v1294 = vpop.f32.mrb[0].mxu0
        %1295 = vdwg.mxu0
        %v1296 = vadd.f32 %v1125, %v1291
        %1297 = vst.msk [vmem:[%s470] sm:$0xff] %vm1066, %v1296
        %s1298 = sand.u32 %s295, 1
        %s1299 = scalar_lea.sflag [#allocation8], %s1298
        %s1300 = sand.u32 %s295, 1
        %s1301 = smul.addr %s1300, 8
        %s1302 = scalar_lea.vmem [#allocation12], %s1301
        // Predicated region
        $region88: #{tpu_custom_call.1} parent=63 // pred_check
          %p1303 = pneg %p305
        $region89: #{tpu_custom_call.1} parent=63 // pred_check_branch
          %1305 = sbr.rel (%p1303) target = $region91
        $region90: #{tpu_custom_call.1} parent=63 // pred_region
          %s1307 = ssub.s32 128, 128
          %1308 = vsyncadd %s1299, %s1307
          %s1309 = smul.addr %s33, 128
          %s1310 = scalar_lea.hbm %s11, %s1309
          %s1312 = sshll.u32 %s1302, 4
          %s1313 = int_to_ptr.vmem [resolvable:$true] %s1312
          %1315 = dma.vmem_to_hbm [thread:$0]  %s1313, 128, %s1310, %s1299
        $region91: #{tpu_custom_call.1} parent=63 // pred_fallthru
          _
      $region64: #{tpu_custom_call.1} parent=5 // pred_fallthru
        _
      %p1316 = scmp.le.s32.totalorder 2, %s24
      // Predicated region
      $region92: #{tpu_custom_call.1} parent=5 // pred_check
        %p1317 = pneg %p1316
      $region93: #{tpu_custom_call.1} parent=5 // pred_check_branch
        %1319 = sbr.rel (%p1317) target = $region95
      $region94: #{tpu_custom_call.1} parent=5 // pred_region
        %s1320 = ssub.s32 %s24, 2
        // Predicated region
        $region96: #{tpu_custom_call.1} parent=94 // pred_check
          %p1321 = pneg %p311
        $region97: #{tpu_custom_call.1} parent=94 // pred_check_branch
          %1323 = sbr.rel (%p1321) target = $region99
        $region98: #{tpu_custom_call.1} parent=94 // pred_region
          %s1324 = sand.u32 %s296, 1
          %s1325 = scalar_lea.sflag [#allocation8], %s1324
          %s1326 = sand.u32 %s296, 1
          %s1327 = smul.addr %s1326, 8
          %s1328 = scalar_lea.vmem [#allocation12], %s1327
          %1329 = dma.done %s1325, 128
        $region99: #{tpu_custom_call.1} parent=94 // pred_fallthru
          _
      $region95: #{tpu_custom_call.1} parent=5 // pred_fallthru
        _
    $region6: #{tpu_custom_call.1} parent=1 // loop_footer
      %s28 = sadd.s32 1, %s24
    $region7: #{tpu_custom_call.1} parent=1 // loop_footer_branch
      %23 = sbr.rel target = $region3
    $region8: #{tpu_custom_call.1} parent=1 // loop_exit
      _
    %1330 = vsyncpa [#allocation7], 1
    %s1331 = scalar_lea.sflag [#allocation7], 1
    %1332 = vsyncpa %s1331, 1
    %1333 = vsyncpa [#allocation10], 1
    %1334 = vsyncpa [#allocation8], 1
    %s1335 = scalar_lea.sflag [#allocation8], 1
    %1336 = vsyncpa %s1335, 1

</llo_original>
